<compile_context>
chip_gen: v5e
topology: v5e:2x2
jax: 0.10.0
libtpu: 0.0.40
codegen_flags: <defaults>
</compile_context>

<pallas_src>
import jax
import jax.numpy as jnp
from jax.experimental import pallas as pl
from jax.experimental.pallas import tpu as pltpu

# Model hyper-parameters from the PyTorch spec.
n_embd = 32
block_size = 8
num_heads = 4
head_size = n_embd // num_heads          # 8
n_blocks = 3
vocab_size = 65                          # len(chars) stand-in (tiny-shakespeare-sized)
VP = 128                                 # vocab padded to a lane-dense 128 for the output


def _round8(n):
    return (n + 7) // 8 * 8


def _slab_layout(BT):
    """Row offsets (all multiples of 8) of each tensor inside the (rows, 128) f32 slab."""
    C = n_embd
    off, r = {}, 0
    off["tok"] = r;  r += VP                 # (VP, C)   token table, rows padded 65 -> 128
    off["pos"] = r;  r += _round8(BT)        # (BT, C)   pre-tiled positional table
    off["mask"] = r; r += _round8(BT)        # (BT, BT)  additive mask (0 / -1e30)
    off["wqkv"] = r; r += n_blocks * C       # per block (C, 3*NH*H), Q columns pre-scaled
    off["wff"] = r;  r += n_blocks * C       # per block (C, C)
    off["bff"] = r;  r += n_blocks * 8       # per block bias in row 0 of an 8-row band
    off["wlm"] = r;  r += C                  # (C, VP)   lane-padded lm_head weight
    off["blm"] = r;  r += 8                  # (1, VP)   lane-padded lm_head bias (row 0)
    off["rows"] = r
    return off


def pack_params(tok_table, pos_table, wqkv, wff, bff, wlm, blm, B, T):
    """Pack all f32 parameters (+ precomputed mask / tiled pos) into one (rows, 128) slab."""
    V, C = tok_table.shape
    BT = B * T
    NHH = num_heads * head_size
    off = _slab_layout(BT)
    slab = jnp.zeros((off["rows"], VP), jnp.float32)

    slab = slab.at[off["tok"]:off["tok"] + V, :C].set(tok_table.astype(jnp.float32))

    pos_tiled = jnp.tile(pos_table[:T].astype(jnp.float32), (B, 1))          # (BT, C)
    slab = slab.at[off["pos"]:off["pos"] + BT, :C].set(pos_tiled)

    # Combined batch-block-diagonal + causal additive mask over the folded (BT, BT) scores.
    # Every row keeps its diagonal unmasked, so -1e30 never produces a fully-masked row.
    r = jnp.arange(BT, dtype=jnp.int32)
    same_batch = (r[:, None] // T) == (r[None, :] // T)
    causal = (r[None, :] % T) <= (r[:, None] % T)
    add_mask = jnp.where(same_batch & causal, 0.0, -1e30).astype(jnp.float32)
    slab = slab.at[off["mask"]:off["mask"] + BT, :BT].set(add_mask)

    # Bake the PyTorch C**-0.5 attention scale into the Q columns at weight-prep time.
    wqkv_scaled = wqkv.astype(jnp.float32).at[:, :, :NHH].multiply(jnp.float32(C) ** -0.5)
    slab = slab.at[off["wqkv"]:off["wqkv"] + n_blocks * C, :3 * NHH].set(
        wqkv_scaled.reshape(n_blocks * C, 3 * NHH))

    slab = slab.at[off["wff"]:off["wff"] + n_blocks * C, :C].set(
        wff.astype(jnp.float32).reshape(n_blocks * C, C))
    for blk in range(n_blocks):
        slab = slab.at[off["bff"] + 8 * blk, :C].set(bff[blk].astype(jnp.float32).reshape(C))

    slab = slab.at[off["wlm"]:off["wlm"] + C, :V].set(wlm.astype(jnp.float32))
    slab = slab.at[off["blm"], :V].set(blm.astype(jnp.float32).reshape(V))
    return slab


def _make_kernel(BT, off):
    C = n_embd
    H = head_size
    NHH = num_heads * head_size

    def kernel(idx_ref, slab_ref, out_ref):
        # ---- Embedding: one-hot (BT, VP) @ token table (VP, C) on the MXU ----------------
        idx = idx_ref[...]                                               # (BT, 1) int32
        iota = jax.lax.broadcasted_iota(jnp.int32, (BT, VP), 1)
        one_hot = (idx == iota).astype(jnp.float32)                      # (BT, VP)
        x = jnp.dot(one_hot, slab_ref[off["tok"]:off["tok"] + VP, :C],
                    preferred_element_type=jnp.float32)                  # (BT, C)
        x = x + slab_ref[off["pos"]:off["pos"] + BT, :C]                 # pre-tiled pos add

        add_mask = slab_ref[off["mask"]:off["mask"] + BT, :BT]           # (BT, BT) additive

        # ---- 3 transformer-ish blocks (no residual / layernorm, per the spec) ------------
        for blk in range(n_blocks):
            wqkv = slab_ref[off["wqkv"] + C * blk: off["wqkv"] + C * (blk + 1), :3 * NHH]
            wff = slab_ref[off["wff"] + C * blk: off["wff"] + C * (blk + 1), :C]
            bff = slab_ref[off["bff"] + 8 * blk: off["bff"] + 8 * blk + 1, :C]    # (1, C)

            # One wide fused QKV projection for all heads: (BT, C) @ (C, 3*NH*H).
            qkv = jnp.dot(x, wqkv, preferred_element_type=jnp.float32)   # (BT, 96)
            q = qkv[:, :NHH]
            kT = qkv[:, NHH:2 * NHH].T                                   # 1 transpose / block
            v = qkv[:, 2 * NHH:3 * NHH]

            ff = jnp.zeros((BT, C), jnp.float32)
            for h in range(num_heads):                                   # Python-unrolled
                lo, hi = h * H, (h + 1) * H
                # Scale already baked into Q weights; mask restores block-diag + causal.
                s = jnp.dot(q[:, lo:hi], kT[lo:hi, :],
                            preferred_element_type=jnp.float32) + add_mask        # (BT, BT)
                m = jnp.max(s, axis=-1, keepdims=True)
                p = jnp.exp(s - m)
                d = jnp.sum(p, axis=-1, keepdims=True)
                inv = pl.reciprocal(d, approx=True)                      # EUP slot
                inv = inv * (2.0 - d * inv)                              # 1 Newton-Raphson step
                o = jnp.dot(p * inv, v[:, lo:hi],
                            preferred_element_type=jnp.float32)          # (BT, H)
                # concat(heads) @ Wff == sum_h o_h @ Wff[hH:(h+1)H]: no lane concat needed.
                ff = ff + jnp.dot(o, wff[lo:hi, :], preferred_element_type=jnp.float32)

            x = jnp.maximum(ff + bff, 0.0)                               # FeedForward + ReLU

        # ---- lm_head: lane-dense (BT, 128) output, sliced back to 65 in the wrapper ------
        wlm = slab_ref[off["wlm"]:off["wlm"] + C, :]                     # (C, VP)
        blm = slab_ref[off["blm"]:off["blm"] + 1, :]                     # (1, VP)
        out_ref[...] = (jnp.dot(x, wlm, preferred_element_type=jnp.float32)
                        + blm).astype(out_ref.dtype)

    return kernel


@jax.jit
def bigram_lm_forward(idx, slab):
    """idx: (B, T) int32 tokens, slab: packed params -> logits (B, T, vocab_size) float32."""
    B, T = idx.shape
    BT = B * T
    off = _slab_layout(BT)

    logits_pad = pl.pallas_call(
        _make_kernel(BT, off),
        out_shape=jax.ShapeDtypeStruct((BT, VP), jnp.float32),
        # No grid: single invocation; 2 VMEM inputs (idx + packed slab), working set ~220 KiB.
        in_specs=[pl.BlockSpec(memory_space=pltpu.MemorySpace.VMEM)] * 2,
        out_specs=pl.BlockSpec(memory_space=pltpu.MemorySpace.VMEM),
    )(idx.reshape(BT, 1).astype(jnp.int32), slab)

    return logits_pad[:, :vocab_size].reshape(B, T, vocab_size)


def _reference(idx, tok_table, pos_table, wqkv, wff, bff, wlm, blm):
    """Pure-JAX reference mirroring the PyTorch forward semantics exactly (unpacked weights)."""
    B, T = idx.shape
    C = tok_table.shape[1]
    H, NH = head_size, num_heads
    NHH = NH * H
    x = tok_table[idx] + pos_table[None, :T]                 # (B, T, C)
    tril = jnp.tril(jnp.ones((T, T), dtype=bool))
    for i in range(n_blocks):
        outs = []
        for h in range(NH):
            wq = wqkv[i][:, h * H:(h + 1) * H]
            wk = wqkv[i][:, NHH + h * H:NHH + (h + 1) * H]
            wv = wqkv[i][:, 2 * NHH + h * H:2 * NHH + (h + 1) * H]
            q, k, v = x @ wq, x @ wk, x @ wv
            s = (q @ jnp.swapaxes(k, -2, -1)) * (C ** -0.5)
            s = jnp.where(tril[None], s, -jnp.inf)
            w = jax.nn.softmax(s, axis=-1)
            outs.append(w @ v)
        x = jnp.concatenate(outs, axis=-1)
        x = jnp.maximum(x @ wff[i] + bff[i], 0.0)
    return x @ wlm + blm


if __name__ == "__main__":
    key = jax.random.PRNGKey(0)
    keys = jax.random.split(key, 8)

    B, T, C, V = 2, block_size, n_embd, vocab_size
    NHH = num_heads * head_size

    idx = jax.random.randint(keys[0], (B, T), 0, V, dtype=jnp.int32)
    tok_table = jax.random.normal(keys[1], (V, C), jnp.float32)
    pos_table = jax.random.normal(keys[2], (T, C), jnp.float32)

    bound = 1.0 / (C ** 0.5)
    # Per-block stacked weights. wqkv columns: [Q heads 0..3 | K heads 0..3 | V heads 0..3].
    wqkv = jax.random.uniform(keys[3], (n_blocks, C, 3 * NHH), jnp.float32, -bound, bound)
    wff = jax.random.uniform(keys[4], (n_blocks, C, C), jnp.float32, -bound, bound)
    bff = jax.random.uniform(keys[5], (n_blocks, 1, C), jnp.float32, -bound, bound)
    wlm = jax.random.uniform(keys[6], (C, V), jnp.float32, -bound, bound)
    blm = jax.random.uniform(keys[7], (1, V), jnp.float32, -bound, bound)

    # One-time weight prep (scale baking, vocab lane-padding, mask/pos precompute, packing).
    slab = jax.block_until_ready(
        pack_params(tok_table, pos_table, wqkv, wff, bff, wlm, blm, B, T))

    logits = jax.block_until_ready(bigram_lm_forward(idx, slab))

    ref = _reference(idx, tok_table, pos_table, wqkv, wff, bff, wlm, blm)
    assert logits.shape == (B, T, V)
    # Newton-refined reciprocal makes the softmax ~exact; remaining tolerance covers matmul
    # rounding differences between the in-kernel MXU path and the XLA reference.
    assert jnp.allclose(logits, ref, atol=2e-2, rtol=2e-2), \
        float(jnp.max(jnp.abs(logits - ref)))

    print("KERNEL_OK")
</pallas_src>

<mosaic_0001>
module attributes {stable_mosaic.version = 11 : i64} {
  func.func @kernel(%arg0: memref<16x1xi32, #tpu.memory_space<vmem>>, %arg1: memref<416x128xf32, #tpu.memory_space<vmem>>, %arg2: memref<16x128xf32, #tpu.memory_space<vmem>>) attributes {dimension_semantics = [], scalar_prefetch = 0 : i64, scratch_operands = 0 : i64, tpu.core_type = #tpu.core_type<tc>} {
    %c0 = arith.constant 0 : index
    %c0_0 = arith.constant 0 : index
    %0 = vector.load %arg0[%c0, %c0_0] : memref<16x1xi32, #tpu.memory_space<vmem>>, vector<16x1xi32>
    %1 = tpu.iota {dimensions = array<i32: 1>} : vector<16x128xi32>
    %2 = vector.broadcast %0 : vector<16x1xi32> to vector<16x128xi32>
    %3 = arith.cmpi eq, %2, %1 : vector<16x128xi32>
    %4 = arith.extui %3 : vector<16x128xi1> to vector<16x128xi32>
    %5 = arith.sitofp %4 : vector<16x128xi32> to vector<16x128xf32>
    %c0_1 = arith.constant 0 : index
    %c0_2 = arith.constant 0 : index
    %6 = vector.load %arg1[%c0_1, %c0_2] : memref<416x128xf32, #tpu.memory_space<vmem>>, vector<128x32xf32>
    %cst = arith.constant dense<0.000000e+00> : vector<16x32xf32>
    %7 = tpu.matmul %5, %6, %cst {dimension_numbers = #tpu.dot_dimension_numbers<[1], [0], [0], [1], [0, 0, 1, 1], [], []>} : vector<16x128xf32>, vector<128x32xf32>, vector<16x32xf32> -> vector<16x32xf32>
    %c128 = arith.constant 128 : index
    %c0_3 = arith.constant 0 : index
    %8 = vector.load %arg1[%c128, %c0_3] : memref<416x128xf32, #tpu.memory_space<vmem>>, vector<16x32xf32>
    %9 = arith.addf %7, %8 : vector<16x32xf32>
    %c144 = arith.constant 144 : index
    %c0_4 = arith.constant 0 : index
    %10 = vector.load %arg1[%c144, %c0_4] : memref<416x128xf32, #tpu.memory_space<vmem>>, vector<16x16xf32>
    %c160 = arith.constant 160 : index
    %c0_5 = arith.constant 0 : index
    %11 = vector.load %arg1[%c160, %c0_5] : memref<416x128xf32, #tpu.memory_space<vmem>>, vector<32x96xf32>
    %c256 = arith.constant 256 : index
    %c0_6 = arith.constant 0 : index
    %12 = vector.load %arg1[%c256, %c0_6] : memref<416x128xf32, #tpu.memory_space<vmem>>, vector<32x32xf32>
    %c352 = arith.constant 352 : index
    %c0_7 = arith.constant 0 : index
    %13 = vector.load %arg1[%c352, %c0_7] : memref<416x128xf32, #tpu.memory_space<vmem>>, vector<1x32xf32>
    %cst_8 = arith.constant dense<0.000000e+00> : vector<16x96xf32>
    %14 = tpu.matmul %9, %11, %cst_8 {dimension_numbers = #tpu.dot_dimension_numbers<[1], [0], [0], [1], [0, 0, 1, 1], [], []>} : vector<16x32xf32>, vector<32x96xf32>, vector<16x96xf32> -> vector<16x96xf32>
    %15 = vector.extract_strided_slice %14 {offsets = [0, 0], sizes = [16, 32], strides = [1, 1]} : vector<16x96xf32> to vector<16x32xf32>
    %16 = vector.extract_strided_slice %14 {offsets = [0, 32], sizes = [16, 32], strides = [1, 1]} : vector<16x96xf32> to vector<16x32xf32>
    %17 = tpu.transpose %16, [1, 0] : vector<16x32xf32> -> vector<32x16xf32>
    %18 = vector.extract_strided_slice %14 {offsets = [0, 64], sizes = [16, 32], strides = [1, 1]} : vector<16x96xf32> to vector<16x32xf32>
    %cst_9 = arith.constant 0.000000e+00 : f32
    %19 = vector.broadcast %cst_9 : f32 to vector<16x32xf32>
    %20 = vector.extract_strided_slice %15 {offsets = [0, 0], sizes = [16, 8], strides = [1, 1]} : vector<16x32xf32> to vector<16x8xf32>
    %21 = vector.extract_strided_slice %17 {offsets = [0, 0], sizes = [8, 16], strides = [1, 1]} : vector<32x16xf32> to vector<8x16xf32>
    %cst_10 = arith.constant dense<0.000000e+00> : vector<16x16xf32>
    %22 = tpu.matmul %20, %21, %cst_10 {dimension_numbers = #tpu.dot_dimension_numbers<[1], [0], [0], [1], [0, 0, 1, 1], [], []>} : vector<16x8xf32>, vector<8x16xf32>, vector<16x16xf32> -> vector<16x16xf32>
    %23 = arith.addf %22, %10 : vector<16x16xf32>
    %cst_11 = arith.constant dense<0xFF800000> : vector<16xf32>
    %24 = vector.multi_reduction <maximumf>, %23, %cst_11 [1] : vector<16x16xf32> to vector<16xf32>
    %25 = vector.shape_cast %24 : vector<16xf32> to vector<16x1xf32>
    %26 = vector.broadcast %25 : vector<16x1xf32> to vector<16x16xf32>
    %27 = arith.subf %23, %26 : vector<16x16xf32>
    %28 = math.exp %27 : vector<16x16xf32>
    %cst_12 = arith.constant dense<0.000000e+00> : vector<16xf32>
    %29 = vector.multi_reduction <add>, %28, %cst_12 [1] : vector<16x16xf32> to vector<16xf32>
    %30 = vector.shape_cast %29 : vector<16xf32> to vector<16x1xf32>
    %31 = tpu.reciprocal %30 {approx = true} : vector<16x1xf32> -> vector<16x1xf32>
    %32 = arith.mulf %30, %31 : vector<16x1xf32>
    %cst_13 = arith.constant 2.000000e+00 : f32
    %33 = vector.broadcast %cst_13 : f32 to vector<16x1xf32>
    %34 = arith.subf %33, %32 : vector<16x1xf32>
    %35 = arith.mulf %31, %34 : vector<16x1xf32>
    %36 = vector.broadcast %35 : vector<16x1xf32> to vector<16x16xf32>
    %37 = arith.mulf %28, %36 : vector<16x16xf32>
    %38 = vector.extract_strided_slice %18 {offsets = [0, 0], sizes = [16, 8], strides = [1, 1]} : vector<16x32xf32> to vector<16x8xf32>
    %cst_14 = arith.constant dense<0.000000e+00> : vector<16x8xf32>
    %39 = tpu.matmul %37, %38, %cst_14 {dimension_numbers = #tpu.dot_dimension_numbers<[1], [0], [0], [1], [0, 0, 1, 1], [], []>} : vector<16x16xf32>, vector<16x8xf32>, vector<16x8xf32> -> vector<16x8xf32>
    %40 = vector.extract_strided_slice %12 {offsets = [0, 0], sizes = [8, 32], strides = [1, 1]} : vector<32x32xf32> to vector<8x32xf32>
    %cst_15 = arith.constant dense<0.000000e+00> : vector<16x32xf32>
    %41 = tpu.matmul %39, %40, %cst_15 {dimension_numbers = #tpu.dot_dimension_numbers<[1], [0], [0], [1], [0, 0, 1, 1], [], []>} : vector<16x8xf32>, vector<8x32xf32>, vector<16x32xf32> -> vector<16x32xf32>
    %42 = arith.addf %19, %41 : vector<16x32xf32>
    %43 = vector.extract_strided_slice %15 {offsets = [0, 8], sizes = [16, 8], strides = [1, 1]} : vector<16x32xf32> to vector<16x8xf32>
    %44 = vector.extract_strided_slice %17 {offsets = [8, 0], sizes = [8, 16], strides = [1, 1]} : vector<32x16xf32> to vector<8x16xf32>
    %cst_16 = arith.constant dense<0.000000e+00> : vector<16x16xf32>
    %45 = tpu.matmul %43, %44, %cst_16 {dimension_numbers = #tpu.dot_dimension_numbers<[1], [0], [0], [1], [0, 0, 1, 1], [], []>} : vector<16x8xf32>, vector<8x16xf32>, vector<16x16xf32> -> vector<16x16xf32>
    %46 = arith.addf %45, %10 : vector<16x16xf32>
    %cst_17 = arith.constant dense<0xFF800000> : vector<16xf32>
    %47 = vector.multi_reduction <maximumf>, %46, %cst_17 [1] : vector<16x16xf32> to vector<16xf32>
    %48 = vector.shape_cast %47 : vector<16xf32> to vector<16x1xf32>
    %49 = vector.broadcast %48 : vector<16x1xf32> to vector<16x16xf32>
    %50 = arith.subf %46, %49 : vector<16x16xf32>
    %51 = math.exp %50 : vector<16x16xf32>
    %cst_18 = arith.constant dense<0.000000e+00> : vector<16xf32>
    %52 = vector.multi_reduction <add>, %51, %cst_18 [1] : vector<16x16xf32> to vector<16xf32>
    %53 = vector.shape_cast %52 : vector<16xf32> to vector<16x1xf32>
    %54 = tpu.reciprocal %53 {approx = true} : vector<16x1xf32> -> vector<16x1xf32>
    %55 = arith.mulf %53, %54 : vector<16x1xf32>
    %cst_19 = arith.constant 2.000000e+00 : f32
    %56 = vector.broadcast %cst_19 : f32 to vector<16x1xf32>
    %57 = arith.subf %56, %55 : vector<16x1xf32>
    %58 = arith.mulf %54, %57 : vector<16x1xf32>
    %59 = vector.broadcast %58 : vector<16x1xf32> to vector<16x16xf32>
    %60 = arith.mulf %51, %59 : vector<16x16xf32>
    %61 = vector.extract_strided_slice %18 {offsets = [0, 8], sizes = [16, 8], strides = [1, 1]} : vector<16x32xf32> to vector<16x8xf32>
    %cst_20 = arith.constant dense<0.000000e+00> : vector<16x8xf32>
    %62 = tpu.matmul %60, %61, %cst_20 {dimension_numbers = #tpu.dot_dimension_numbers<[1], [0], [0], [1], [0, 0, 1, 1], [], []>} : vector<16x16xf32>, vector<16x8xf32>, vector<16x8xf32> -> vector<16x8xf32>
    %63 = vector.extract_strided_slice %12 {offsets = [8, 0], sizes = [8, 32], strides = [1, 1]} : vector<32x32xf32> to vector<8x32xf32>
    %cst_21 = arith.constant dense<0.000000e+00> : vector<16x32xf32>
    %64 = tpu.matmul %62, %63, %cst_21 {dimension_numbers = #tpu.dot_dimension_numbers<[1], [0], [0], [1], [0, 0, 1, 1], [], []>} : vector<16x8xf32>, vector<8x32xf32>, vector<16x32xf32> -> vector<16x32xf32>
    %65 = arith.addf %42, %64 : vector<16x32xf32>
    %66 = vector.extract_strided_slice %15 {offsets = [0, 16], sizes = [16, 8], strides = [1, 1]} : vector<16x32xf32> to vector<16x8xf32>
    %67 = vector.extract_strided_slice %17 {offsets = [16, 0], sizes = [8, 16], strides = [1, 1]} : vector<32x16xf32> to vector<8x16xf32>
    %cst_22 = arith.constant dense<0.000000e+00> : vector<16x16xf32>
    %68 = tpu.matmul %66, %67, %cst_22 {dimension_numbers = #tpu.dot_dimension_numbers<[1], [0], [0], [1], [0, 0, 1, 1], [], []>} : vector<16x8xf32>, vector<8x16xf32>, vector<16x16xf32> -> vector<16x16xf32>
    %69 = arith.addf %68, %10 : vector<16x16xf32>
    %cst_23 = arith.constant dense<0xFF800000> : vector<16xf32>
    %70 = vector.multi_reduction <maximumf>, %69, %cst_23 [1] : vector<16x16xf32> to vector<16xf32>
    %71 = vector.shape_cast %70 : vector<16xf32> to vector<16x1xf32>
    %72 = vector.broadcast %71 : vector<16x1xf32> to vector<16x16xf32>
    %73 = arith.subf %69, %72 : vector<16x16xf32>
    %74 = math.exp %73 : vector<16x16xf32>
    %cst_24 = arith.constant dense<0.000000e+00> : vector<16xf32>
    %75 = vector.multi_reduction <add>, %74, %cst_24 [1] : vector<16x16xf32> to vector<16xf32>
    %76 = vector.shape_cast %75 : vector<16xf32> to vector<16x1xf32>
    %77 = tpu.reciprocal %76 {approx = true} : vector<16x1xf32> -> vector<16x1xf32>
    %78 = arith.mulf %76, %77 : vector<16x1xf32>
    %cst_25 = arith.constant 2.000000e+00 : f32
    %79 = vector.broadcast %cst_25 : f32 to vector<16x1xf32>
    %80 = arith.subf %79, %78 : vector<16x1xf32>
    %81 = arith.mulf %77, %80 : vector<16x1xf32>
    %82 = vector.broadcast %81 : vector<16x1xf32> to vector<16x16xf32>
    %83 = arith.mulf %74, %82 : vector<16x16xf32>
    %84 = vector.extract_strided_slice %18 {offsets = [0, 16], sizes = [16, 8], strides = [1, 1]} : vector<16x32xf32> to vector<16x8xf32>
    %cst_26 = arith.constant dense<0.000000e+00> : vector<16x8xf32>
    %85 = tpu.matmul %83, %84, %cst_26 {dimension_numbers = #tpu.dot_dimension_numbers<[1], [0], [0], [1], [0, 0, 1, 1], [], []>} : vector<16x16xf32>, vector<16x8xf32>, vector<16x8xf32> -> vector<16x8xf32>
    %86 = vector.extract_strided_slice %12 {offsets = [16, 0], sizes = [8, 32], strides = [1, 1]} : vector<32x32xf32> to vector<8x32xf32>
    %cst_27 = arith.constant dense<0.000000e+00> : vector<16x32xf32>
    %87 = tpu.matmul %85, %86, %cst_27 {dimension_numbers = #tpu.dot_dimension_numbers<[1], [0], [0], [1], [0, 0, 1, 1], [], []>} : vector<16x8xf32>, vector<8x32xf32>, vector<16x32xf32> -> vector<16x32xf32>
    %88 = arith.addf %65, %87 : vector<16x32xf32>
    %89 = vector.extract_strided_slice %15 {offsets = [0, 24], sizes = [16, 8], strides = [1, 1]} : vector<16x32xf32> to vector<16x8xf32>
    %90 = vector.extract_strided_slice %17 {offsets = [24, 0], sizes = [8, 16], strides = [1, 1]} : vector<32x16xf32> to vector<8x16xf32>
    %cst_28 = arith.constant dense<0.000000e+00> : vector<16x16xf32>
    %91 = tpu.matmul %89, %90, %cst_28 {dimension_numbers = #tpu.dot_dimension_numbers<[1], [0], [0], [1], [0, 0, 1, 1], [], []>} : vector<16x8xf32>, vector<8x16xf32>, vector<16x16xf32> -> vector<16x16xf32>
    %92 = arith.addf %91, %10 : vector<16x16xf32>
    %cst_29 = arith.constant dense<0xFF800000> : vector<16xf32>
    %93 = vector.multi_reduction <maximumf>, %92, %cst_29 [1] : vector<16x16xf32> to vector<16xf32>
    %94 = vector.shape_cast %93 : vector<16xf32> to vector<16x1xf32>
    %95 = vector.broadcast %94 : vector<16x1xf32> to vector<16x16xf32>
    %96 = arith.subf %92, %95 : vector<16x16xf32>
    %97 = math.exp %96 : vector<16x16xf32>
    %cst_30 = arith.constant dense<0.000000e+00> : vector<16xf32>
    %98 = vector.multi_reduction <add>, %97, %cst_30 [1] : vector<16x16xf32> to vector<16xf32>
    %99 = vector.shape_cast %98 : vector<16xf32> to vector<16x1xf32>
    %100 = tpu.reciprocal %99 {approx = true} : vector<16x1xf32> -> vector<16x1xf32>
    %101 = arith.mulf %99, %100 : vector<16x1xf32>
    %cst_31 = arith.constant 2.000000e+00 : f32
    %102 = vector.broadcast %cst_31 : f32 to vector<16x1xf32>
    %103 = arith.subf %102, %101 : vector<16x1xf32>
    %104 = arith.mulf %100, %103 : vector<16x1xf32>
    %105 = vector.broadcast %104 : vector<16x1xf32> to vector<16x16xf32>
    %106 = arith.mulf %97, %105 : vector<16x16xf32>
    %107 = vector.extract_strided_slice %18 {offsets = [0, 24], sizes = [16, 8], strides = [1, 1]} : vector<16x32xf32> to vector<16x8xf32>
    %cst_32 = arith.constant dense<0.000000e+00> : vector<16x8xf32>
    %108 = tpu.matmul %106, %107, %cst_32 {dimension_numbers = #tpu.dot_dimension_numbers<[1], [0], [0], [1], [0, 0, 1, 1], [], []>} : vector<16x16xf32>, vector<16x8xf32>, vector<16x8xf32> -> vector<16x8xf32>
    %109 = vector.extract_strided_slice %12 {offsets = [24, 0], sizes = [8, 32], strides = [1, 1]} : vector<32x32xf32> to vector<8x32xf32>
    %cst_33 = arith.constant dense<0.000000e+00> : vector<16x32xf32>
    %110 = tpu.matmul %108, %109, %cst_33 {dimension_numbers = #tpu.dot_dimension_numbers<[1], [0], [0], [1], [0, 0, 1, 1], [], []>} : vector<16x8xf32>, vector<8x32xf32>, vector<16x32xf32> -> vector<16x32xf32>
    %111 = arith.addf %88, %110 : vector<16x32xf32>
    %112 = vector.broadcast %13 : vector<1x32xf32> to vector<16x32xf32>
    %113 = arith.addf %111, %112 : vector<16x32xf32>
    %cst_34 = arith.constant 0.000000e+00 : f32
    %114 = vector.broadcast %cst_34 : f32 to vector<16x32xf32>
    %115 = arith.maximumf %113, %114 : vector<16x32xf32>
    %c192 = arith.constant 192 : index
    %c0_35 = arith.constant 0 : index
    %116 = vector.load %arg1[%c192, %c0_35] : memref<416x128xf32, #tpu.memory_space<vmem>>, vector<32x96xf32>
    %c288 = arith.constant 288 : index
    %c0_36 = arith.constant 0 : index
    %117 = vector.load %arg1[%c288, %c0_36] : memref<416x128xf32, #tpu.memory_space<vmem>>, vector<32x32xf32>
    %c360 = arith.constant 360 : index
    %c0_37 = arith.constant 0 : index
    %118 = vector.load %arg1[%c360, %c0_37] : memref<416x128xf32, #tpu.memory_space<vmem>>, vector<1x32xf32>
    %cst_38 = arith.constant dense<0.000000e+00> : vector<16x96xf32>
    %119 = tpu.matmul %115, %116, %cst_38 {dimension_numbers = #tpu.dot_dimension_numbers<[1], [0], [0], [1], [0, 0, 1, 1], [], []>} : vector<16x32xf32>, vector<32x96xf32>, vector<16x96xf32> -> vector<16x96xf32>
    %120 = vector.extract_strided_slice %119 {offsets = [0, 0], sizes = [16, 32], strides = [1, 1]} : vector<16x96xf32> to vector<16x32xf32>
    %121 = vector.extract_strided_slice %119 {offsets = [0, 32], sizes = [16, 32], strides = [1, 1]} : vector<16x96xf32> to vector<16x32xf32>
    %122 = tpu.transpose %121, [1, 0] : vector<16x32xf32> -> vector<32x16xf32>
    %123 = vector.extract_strided_slice %119 {offsets = [0, 64], sizes = [16, 32], strides = [1, 1]} : vector<16x96xf32> to vector<16x32xf32>
    %cst_39 = arith.constant 0.000000e+00 : f32
    %124 = vector.broadcast %cst_39 : f32 to vector<16x32xf32>
    %125 = vector.extract_strided_slice %120 {offsets = [0, 0], sizes = [16, 8], strides = [1, 1]} : vector<16x32xf32> to vector<16x8xf32>
    %126 = vector.extract_strided_slice %122 {offsets = [0, 0], sizes = [8, 16], strides = [1, 1]} : vector<32x16xf32> to vector<8x16xf32>
    %cst_40 = arith.constant dense<0.000000e+00> : vector<16x16xf32>
    %127 = tpu.matmul %125, %126, %cst_40 {dimension_numbers = #tpu.dot_dimension_numbers<[1], [0], [0], [1], [0, 0, 1, 1], [], []>} : vector<16x8xf32>, vector<8x16xf32>, vector<16x16xf32> -> vector<16x16xf32>
    %128 = arith.addf %127, %10 : vector<16x16xf32>
    %cst_41 = arith.constant dense<0xFF800000> : vector<16xf32>
    %129 = vector.multi_reduction <maximumf>, %128, %cst_41 [1] : vector<16x16xf32> to vector<16xf32>
    %130 = vector.shape_cast %129 : vector<16xf32> to vector<16x1xf32>
    %131 = vector.broadcast %130 : vector<16x1xf32> to vector<16x16xf32>
    %132 = arith.subf %128, %131 : vector<16x16xf32>
    %133 = math.exp %132 : vector<16x16xf32>
    %cst_42 = arith.constant dense<0.000000e+00> : vector<16xf32>
    %134 = vector.multi_reduction <add>, %133, %cst_42 [1] : vector<16x16xf32> to vector<16xf32>
    %135 = vector.shape_cast %134 : vector<16xf32> to vector<16x1xf32>
    %136 = tpu.reciprocal %135 {approx = true} : vector<16x1xf32> -> vector<16x1xf32>
    %137 = arith.mulf %135, %136 : vector<16x1xf32>
    %cst_43 = arith.constant 2.000000e+00 : f32
    %138 = vector.broadcast %cst_43 : f32 to vector<16x1xf32>
    %139 = arith.subf %138, %137 : vector<16x1xf32>
    %140 = arith.mulf %136, %139 : vector<16x1xf32>
    %141 = vector.broadcast %140 : vector<16x1xf32> to vector<16x16xf32>
    %142 = arith.mulf %133, %141 : vector<16x16xf32>
    %143 = vector.extract_strided_slice %123 {offsets = [0, 0], sizes = [16, 8], strides = [1, 1]} : vector<16x32xf32> to vector<16x8xf32>
    %cst_44 = arith.constant dense<0.000000e+00> : vector<16x8xf32>
    %144 = tpu.matmul %142, %143, %cst_44 {dimension_numbers = #tpu.dot_dimension_numbers<[1], [0], [0], [1], [0, 0, 1, 1], [], []>} : vector<16x16xf32>, vector<16x8xf32>, vector<16x8xf32> -> vector<16x8xf32>
    %145 = vector.extract_strided_slice %117 {offsets = [0, 0], sizes = [8, 32], strides = [1, 1]} : vector<32x32xf32> to vector<8x32xf32>
    %cst_45 = arith.constant dense<0.000000e+00> : vector<16x32xf32>
    %146 = tpu.matmul %144, %145, %cst_45 {dimension_numbers = #tpu.dot_dimension_numbers<[1], [0], [0], [1], [0, 0, 1, 1], [], []>} : vector<16x8xf32>, vector<8x32xf32>, vector<16x32xf32> -> vector<16x32xf32>
    %147 = arith.addf %124, %146 : vector<16x32xf32>
    %148 = vector.extract_strided_slice %120 {offsets = [0, 8], sizes = [16, 8], strides = [1, 1]} : vector<16x32xf32> to vector<16x8xf32>
    %149 = vector.extract_strided_slice %122 {offsets = [8, 0], sizes = [8, 16], strides = [1, 1]} : vector<32x16xf32> to vector<8x16xf32>
    %cst_46 = arith.constant dense<0.000000e+00> : vector<16x16xf32>
    %150 = tpu.matmul %148, %149, %cst_46 {dimension_numbers = #tpu.dot_dimension_numbers<[1], [0], [0], [1], [0, 0, 1, 1], [], []>} : vector<16x8xf32>, vector<8x16xf32>, vector<16x16xf32> -> vector<16x16xf32>
    %151 = arith.addf %150, %10 : vector<16x16xf32>
    %cst_47 = arith.constant dense<0xFF800000> : vector<16xf32>
    %152 = vector.multi_reduction <maximumf>, %151, %cst_47 [1] : vector<16x16xf32> to vector<16xf32>
    %153 = vector.shape_cast %152 : vector<16xf32> to vector<16x1xf32>
    %154 = vector.broadcast %153 : vector<16x1xf32> to vector<16x16xf32>
    %155 = arith.subf %151, %154 : vector<16x16xf32>
    %156 = math.exp %155 : vector<16x16xf32>
    %cst_48 = arith.constant dense<0.000000e+00> : vector<16xf32>
    %157 = vector.multi_reduction <add>, %156, %cst_48 [1] : vector<16x16xf32> to vector<16xf32>
    %158 = vector.shape_cast %157 : vector<16xf32> to vector<16x1xf32>
    %159 = tpu.reciprocal %158 {approx = true} : vector<16x1xf32> -> vector<16x1xf32>
    %160 = arith.mulf %158, %159 : vector<16x1xf32>
    %cst_49 = arith.constant 2.000000e+00 : f32
    %161 = vector.broadcast %cst_49 : f32 to vector<16x1xf32>
    %162 = arith.subf %161, %160 : vector<16x1xf32>
    %163 = arith.mulf %159, %162 : vector<16x1xf32>
    %164 = vector.broadcast %163 : vector<16x1xf32> to vector<16x16xf32>
    %165 = arith.mulf %156, %164 : vector<16x16xf32>
    %166 = vector.extract_strided_slice %123 {offsets = [0, 8], sizes = [16, 8], strides = [1, 1]} : vector<16x32xf32> to vector<16x8xf32>
    %cst_50 = arith.constant dense<0.000000e+00> : vector<16x8xf32>
    %167 = tpu.matmul %165, %166, %cst_50 {dimension_numbers = #tpu.dot_dimension_numbers<[1], [0], [0], [1], [0, 0, 1, 1], [], []>} : vector<16x16xf32>, vector<16x8xf32>, vector<16x8xf32> -> vector<16x8xf32>
    %168 = vector.extract_strided_slice %117 {offsets = [8, 0], sizes = [8, 32], strides = [1, 1]} : vector<32x32xf32> to vector<8x32xf32>
    %cst_51 = arith.constant dense<0.000000e+00> : vector<16x32xf32>
    %169 = tpu.matmul %167, %168, %cst_51 {dimension_numbers = #tpu.dot_dimension_numbers<[1], [0], [0], [1], [0, 0, 1, 1], [], []>} : vector<16x8xf32>, vector<8x32xf32>, vector<16x32xf32> -> vector<16x32xf32>
    %170 = arith.addf %147, %169 : vector<16x32xf32>
    %171 = vector.extract_strided_slice %120 {offsets = [0, 16], sizes = [16, 8], strides = [1, 1]} : vector<16x32xf32> to vector<16x8xf32>
    %172 = vector.extract_strided_slice %122 {offsets = [16, 0], sizes = [8, 16], strides = [1, 1]} : vector<32x16xf32> to vector<8x16xf32>
    %cst_52 = arith.constant dense<0.000000e+00> : vector<16x16xf32>
    %173 = tpu.matmul %171, %172, %cst_52 {dimension_numbers = #tpu.dot_dimension_numbers<[1], [0], [0], [1], [0, 0, 1, 1], [], []>} : vector<16x8xf32>, vector<8x16xf32>, vector<16x16xf32> -> vector<16x16xf32>
    %174 = arith.addf %173, %10 : vector<16x16xf32>
    %cst_53 = arith.constant dense<0xFF800000> : vector<16xf32>
    %175 = vector.multi_reduction <maximumf>, %174, %cst_53 [1] : vector<16x16xf32> to vector<16xf32>
    %176 = vector.shape_cast %175 : vector<16xf32> to vector<16x1xf32>
    %177 = vector.broadcast %176 : vector<16x1xf32> to vector<16x16xf32>
    %178 = arith.subf %174, %177 : vector<16x16xf32>
    %179 = math.exp %178 : vector<16x16xf32>
    %cst_54 = arith.constant dense<0.000000e+00> : vector<16xf32>
    %180 = vector.multi_reduction <add>, %179, %cst_54 [1] : vector<16x16xf32> to vector<16xf32>
    %181 = vector.shape_cast %180 : vector<16xf32> to vector<16x1xf32>
    %182 = tpu.reciprocal %181 {approx = true} : vector<16x1xf32> -> vector<16x1xf32>
    %183 = arith.mulf %181, %182 : vector<16x1xf32>
    %cst_55 = arith.constant 2.000000e+00 : f32
    %184 = vector.broadcast %cst_55 : f32 to vector<16x1xf32>
    %185 = arith.subf %184, %183 : vector<16x1xf32>
    %186 = arith.mulf %182, %185 : vector<16x1xf32>
    %187 = vector.broadcast %186 : vector<16x1xf32> to vector<16x16xf32>
    %188 = arith.mulf %179, %187 : vector<16x16xf32>
    %189 = vector.extract_strided_slice %123 {offsets = [0, 16], sizes = [16, 8], strides = [1, 1]} : vector<16x32xf32> to vector<16x8xf32>
    %cst_56 = arith.constant dense<0.000000e+00> : vector<16x8xf32>
    %190 = tpu.matmul %188, %189, %cst_56 {dimension_numbers = #tpu.dot_dimension_numbers<[1], [0], [0], [1], [0, 0, 1, 1], [], []>} : vector<16x16xf32>, vector<16x8xf32>, vector<16x8xf32> -> vector<16x8xf32>
    %191 = vector.extract_strided_slice %117 {offsets = [16, 0], sizes = [8, 32], strides = [1, 1]} : vector<32x32xf32> to vector<8x32xf32>
    %cst_57 = arith.constant dense<0.000000e+00> : vector<16x32xf32>
    %192 = tpu.matmul %190, %191, %cst_57 {dimension_numbers = #tpu.dot_dimension_numbers<[1], [0], [0], [1], [0, 0, 1, 1], [], []>} : vector<16x8xf32>, vector<8x32xf32>, vector<16x32xf32> -> vector<16x32xf32>
    %193 = arith.addf %170, %192 : vector<16x32xf32>
    %194 = vector.extract_strided_slice %120 {offsets = [0, 24], sizes = [16, 8], strides = [1, 1]} : vector<16x32xf32> to vector<16x8xf32>
    %195 = vector.extract_strided_slice %122 {offsets = [24, 0], sizes = [8, 16], strides = [1, 1]} : vector<32x16xf32> to vector<8x16xf32>
    %cst_58 = arith.constant dense<0.000000e+00> : vector<16x16xf32>
    %196 = tpu.matmul %194, %195, %cst_58 {dimension_numbers = #tpu.dot_dimension_numbers<[1], [0], [0], [1], [0, 0, 1, 1], [], []>} : vector<16x8xf32>, vector<8x16xf32>, vector<16x16xf32> -> vector<16x16xf32>
    %197 = arith.addf %196, %10 : vector<16x16xf32>
    %cst_59 = arith.constant dense<0xFF800000> : vector<16xf32>
    %198 = vector.multi_reduction <maximumf>, %197, %cst_59 [1] : vector<16x16xf32> to vector<16xf32>
    %199 = vector.shape_cast %198 : vector<16xf32> to vector<16x1xf32>
    %200 = vector.broadcast %199 : vector<16x1xf32> to vector<16x16xf32>
    %201 = arith.subf %197, %200 : vector<16x16xf32>
    %202 = math.exp %201 : vector<16x16xf32>
    %cst_60 = arith.constant dense<0.000000e+00> : vector<16xf32>
    %203 = vector.multi_reduction <add>, %202, %cst_60 [1] : vector<16x16xf32> to vector<16xf32>
    %204 = vector.shape_cast %203 : vector<16xf32> to vector<16x1xf32>
    %205 = tpu.reciprocal %204 {approx = true} : vector<16x1xf32> -> vector<16x1xf32>
    %206 = arith.mulf %204, %205 : vector<16x1xf32>
    %cst_61 = arith.constant 2.000000e+00 : f32
    %207 = vector.broadcast %cst_61 : f32 to vector<16x1xf32>
    %208 = arith.subf %207, %206 : vector<16x1xf32>
    %209 = arith.mulf %205, %208 : vector<16x1xf32>
    %210 = vector.broadcast %209 : vector<16x1xf32> to vector<16x16xf32>
    %211 = arith.mulf %202, %210 : vector<16x16xf32>
    %212 = vector.extract_strided_slice %123 {offsets = [0, 24], sizes = [16, 8], strides = [1, 1]} : vector<16x32xf32> to vector<16x8xf32>
    %cst_62 = arith.constant dense<0.000000e+00> : vector<16x8xf32>
    %213 = tpu.matmul %211, %212, %cst_62 {dimension_numbers = #tpu.dot_dimension_numbers<[1], [0], [0], [1], [0, 0, 1, 1], [], []>} : vector<16x16xf32>, vector<16x8xf32>, vector<16x8xf32> -> vector<16x8xf32>
    %214 = vector.extract_strided_slice %117 {offsets = [24, 0], sizes = [8, 32], strides = [1, 1]} : vector<32x32xf32> to vector<8x32xf32>
    %cst_63 = arith.constant dense<0.000000e+00> : vector<16x32xf32>
    %215 = tpu.matmul %213, %214, %cst_63 {dimension_numbers = #tpu.dot_dimension_numbers<[1], [0], [0], [1], [0, 0, 1, 1], [], []>} : vector<16x8xf32>, vector<8x32xf32>, vector<16x32xf32> -> vector<16x32xf32>
    %216 = arith.addf %193, %215 : vector<16x32xf32>
    %217 = vector.broadcast %118 : vector<1x32xf32> to vector<16x32xf32>
    %218 = arith.addf %216, %217 : vector<16x32xf32>
    %cst_64 = arith.constant 0.000000e+00 : f32
    %219 = vector.broadcast %cst_64 : f32 to vector<16x32xf32>
    %220 = arith.maximumf %218, %219 : vector<16x32xf32>
    %c224 = arith.constant 224 : index
    %c0_65 = arith.constant 0 : index
    %221 = vector.load %arg1[%c224, %c0_65] : memref<416x128xf32, #tpu.memory_space<vmem>>, vector<32x96xf32>
    %c320 = arith.constant 320 : index
    %c0_66 = arith.constant 0 : index
    %222 = vector.load %arg1[%c320, %c0_66] : memref<416x128xf32, #tpu.memory_space<vmem>>, vector<32x32xf32>
    %c368 = arith.constant 368 : index
    %c0_67 = arith.constant 0 : index
    %223 = vector.load %arg1[%c368, %c0_67] : memref<416x128xf32, #tpu.memory_space<vmem>>, vector<1x32xf32>
    %cst_68 = arith.constant dense<0.000000e+00> : vector<16x96xf32>
    %224 = tpu.matmul %220, %221, %cst_68 {dimension_numbers = #tpu.dot_dimension_numbers<[1], [0], [0], [1], [0, 0, 1, 1], [], []>} : vector<16x32xf32>, vector<32x96xf32>, vector<16x96xf32> -> vector<16x96xf32>
    %225 = vector.extract_strided_slice %224 {offsets = [0, 0], sizes = [16, 32], strides = [1, 1]} : vector<16x96xf32> to vector<16x32xf32>
    %226 = vector.extract_strided_slice %224 {offsets = [0, 32], sizes = [16, 32], strides = [1, 1]} : vector<16x96xf32> to vector<16x32xf32>
    %227 = tpu.transpose %226, [1, 0] : vector<16x32xf32> -> vector<32x16xf32>
    %228 = vector.extract_strided_slice %224 {offsets = [0, 64], sizes = [16, 32], strides = [1, 1]} : vector<16x96xf32> to vector<16x32xf32>
    %cst_69 = arith.constant 0.000000e+00 : f32
    %229 = vector.broadcast %cst_69 : f32 to vector<16x32xf32>
    %230 = vector.extract_strided_slice %225 {offsets = [0, 0], sizes = [16, 8], strides = [1, 1]} : vector<16x32xf32> to vector<16x8xf32>
    %231 = vector.extract_strided_slice %227 {offsets = [0, 0], sizes = [8, 16], strides = [1, 1]} : vector<32x16xf32> to vector<8x16xf32>
    %cst_70 = arith.constant dense<0.000000e+00> : vector<16x16xf32>
    %232 = tpu.matmul %230, %231, %cst_70 {dimension_numbers = #tpu.dot_dimension_numbers<[1], [0], [0], [1], [0, 0, 1, 1], [], []>} : vector<16x8xf32>, vector<8x16xf32>, vector<16x16xf32> -> vector<16x16xf32>
    %233 = arith.addf %232, %10 : vector<16x16xf32>
    %cst_71 = arith.constant dense<0xFF800000> : vector<16xf32>
    %234 = vector.multi_reduction <maximumf>, %233, %cst_71 [1] : vector<16x16xf32> to vector<16xf32>
    %235 = vector.shape_cast %234 : vector<16xf32> to vector<16x1xf32>
    %236 = vector.broadcast %235 : vector<16x1xf32> to vector<16x16xf32>
    %237 = arith.subf %233, %236 : vector<16x16xf32>
    %238 = math.exp %237 : vector<16x16xf32>
    %cst_72 = arith.constant dense<0.000000e+00> : vector<16xf32>
    %239 = vector.multi_reduction <add>, %238, %cst_72 [1] : vector<16x16xf32> to vector<16xf32>
    %240 = vector.shape_cast %239 : vector<16xf32> to vector<16x1xf32>
    %241 = tpu.reciprocal %240 {approx = true} : vector<16x1xf32> -> vector<16x1xf32>
    %242 = arith.mulf %240, %241 : vector<16x1xf32>
    %cst_73 = arith.constant 2.000000e+00 : f32
    %243 = vector.broadcast %cst_73 : f32 to vector<16x1xf32>
    %244 = arith.subf %243, %242 : vector<16x1xf32>
    %245 = arith.mulf %241, %244 : vector<16x1xf32>
    %246 = vector.broadcast %245 : vector<16x1xf32> to vector<16x16xf32>
    %247 = arith.mulf %238, %246 : vector<16x16xf32>
    %248 = vector.extract_strided_slice %228 {offsets = [0, 0], sizes = [16, 8], strides = [1, 1]} : vector<16x32xf32> to vector<16x8xf32>
    %cst_74 = arith.constant dense<0.000000e+00> : vector<16x8xf32>
    %249 = tpu.matmul %247, %248, %cst_74 {dimension_numbers = #tpu.dot_dimension_numbers<[1], [0], [0], [1], [0, 0, 1, 1], [], []>} : vector<16x16xf32>, vector<16x8xf32>, vector<16x8xf32> -> vector<16x8xf32>
    %250 = vector.extract_strided_slice %222 {offsets = [0, 0], sizes = [8, 32], strides = [1, 1]} : vector<32x32xf32> to vector<8x32xf32>
    %cst_75 = arith.constant dense<0.000000e+00> : vector<16x32xf32>
    %251 = tpu.matmul %249, %250, %cst_75 {dimension_numbers = #tpu.dot_dimension_numbers<[1], [0], [0], [1], [0, 0, 1, 1], [], []>} : vector<16x8xf32>, vector<8x32xf32>, vector<16x32xf32> -> vector<16x32xf32>
    %252 = arith.addf %229, %251 : vector<16x32xf32>
    %253 = vector.extract_strided_slice %225 {offsets = [0, 8], sizes = [16, 8], strides = [1, 1]} : vector<16x32xf32> to vector<16x8xf32>
    %254 = vector.extract_strided_slice %227 {offsets = [8, 0], sizes = [8, 16], strides = [1, 1]} : vector<32x16xf32> to vector<8x16xf32>
    %cst_76 = arith.constant dense<0.000000e+00> : vector<16x16xf32>
    %255 = tpu.matmul %253, %254, %cst_76 {dimension_numbers = #tpu.dot_dimension_numbers<[1], [0], [0], [1], [0, 0, 1, 1], [], []>} : vector<16x8xf32>, vector<8x16xf32>, vector<16x16xf32> -> vector<16x16xf32>
    %256 = arith.addf %255, %10 : vector<16x16xf32>
    %cst_77 = arith.constant dense<0xFF800000> : vector<16xf32>
    %257 = vector.multi_reduction <maximumf>, %256, %cst_77 [1] : vector<16x16xf32> to vector<16xf32>
    %258 = vector.shape_cast %257 : vector<16xf32> to vector<16x1xf32>
    %259 = vector.broadcast %258 : vector<16x1xf32> to vector<16x16xf32>
    %260 = arith.subf %256, %259 : vector<16x16xf32>
    %261 = math.exp %260 : vector<16x16xf32>
    %cst_78 = arith.constant dense<0.000000e+00> : vector<16xf32>
    %262 = vector.multi_reduction <add>, %261, %cst_78 [1] : vector<16x16xf32> to vector<16xf32>
    %263 = vector.shape_cast %262 : vector<16xf32> to vector<16x1xf32>
    %264 = tpu.reciprocal %263 {approx = true} : vector<16x1xf32> -> vector<16x1xf32>
    %265 = arith.mulf %263, %264 : vector<16x1xf32>
    %cst_79 = arith.constant 2.000000e+00 : f32
    %266 = vector.broadcast %cst_79 : f32 to vector<16x1xf32>
    %267 = arith.subf %266, %265 : vector<16x1xf32>
    %268 = arith.mulf %264, %267 : vector<16x1xf32>
    %269 = vector.broadcast %268 : vector<16x1xf32> to vector<16x16xf32>
    %270 = arith.mulf %261, %269 : vector<16x16xf32>
    %271 = vector.extract_strided_slice %228 {offsets = [0, 8], sizes = [16, 8], strides = [1, 1]} : vector<16x32xf32> to vector<16x8xf32>
    %cst_80 = arith.constant dense<0.000000e+00> : vector<16x8xf32>
    %272 = tpu.matmul %270, %271, %cst_80 {dimension_numbers = #tpu.dot_dimension_numbers<[1], [0], [0], [1], [0, 0, 1, 1], [], []>} : vector<16x16xf32>, vector<16x8xf32>, vector<16x8xf32> -> vector<16x8xf32>
    %273 = vector.extract_strided_slice %222 {offsets = [8, 0], sizes = [8, 32], strides = [1, 1]} : vector<32x32xf32> to vector<8x32xf32>
    %cst_81 = arith.constant dense<0.000000e+00> : vector<16x32xf32>
    %274 = tpu.matmul %272, %273, %cst_81 {dimension_numbers = #tpu.dot_dimension_numbers<[1], [0], [0], [1], [0, 0, 1, 1], [], []>} : vector<16x8xf32>, vector<8x32xf32>, vector<16x32xf32> -> vector<16x32xf32>
    %275 = arith.addf %252, %274 : vector<16x32xf32>
    %276 = vector.extract_strided_slice %225 {offsets = [0, 16], sizes = [16, 8], strides = [1, 1]} : vector<16x32xf32> to vector<16x8xf32>
    %277 = vector.extract_strided_slice %227 {offsets = [16, 0], sizes = [8, 16], strides = [1, 1]} : vector<32x16xf32> to vector<8x16xf32>
    %cst_82 = arith.constant dense<0.000000e+00> : vector<16x16xf32>
    %278 = tpu.matmul %276, %277, %cst_82 {dimension_numbers = #tpu.dot_dimension_numbers<[1], [0], [0], [1], [0, 0, 1, 1], [], []>} : vector<16x8xf32>, vector<8x16xf32>, vector<16x16xf32> -> vector<16x16xf32>
    %279 = arith.addf %278, %10 : vector<16x16xf32>
    %cst_83 = arith.constant dense<0xFF800000> : vector<16xf32>
    %280 = vector.multi_reduction <maximumf>, %279, %cst_83 [1] : vector<16x16xf32> to vector<16xf32>
    %281 = vector.shape_cast %280 : vector<16xf32> to vector<16x1xf32>
    %282 = vector.broadcast %281 : vector<16x1xf32> to vector<16x16xf32>
    %283 = arith.subf %279, %282 : vector<16x16xf32>
    %284 = math.exp %283 : vector<16x16xf32>
    %cst_84 = arith.constant dense<0.000000e+00> : vector<16xf32>
    %285 = vector.multi_reduction <add>, %284, %cst_84 [1] : vector<16x16xf32> to vector<16xf32>
    %286 = vector.shape_cast %285 : vector<16xf32> to vector<16x1xf32>
    %287 = tpu.reciprocal %286 {approx = true} : vector<16x1xf32> -> vector<16x1xf32>
    %288 = arith.mulf %286, %287 : vector<16x1xf32>
    %cst_85 = arith.constant 2.000000e+00 : f32
    %289 = vector.broadcast %cst_85 : f32 to vector<16x1xf32>
    %290 = arith.subf %289, %288 : vector<16x1xf32>
    %291 = arith.mulf %287, %290 : vector<16x1xf32>
    %292 = vector.broadcast %291 : vector<16x1xf32> to vector<16x16xf32>
    %293 = arith.mulf %284, %292 : vector<16x16xf32>
    %294 = vector.extract_strided_slice %228 {offsets = [0, 16], sizes = [16, 8], strides = [1, 1]} : vector<16x32xf32> to vector<16x8xf32>
    %cst_86 = arith.constant dense<0.000000e+00> : vector<16x8xf32>
    %295 = tpu.matmul %293, %294, %cst_86 {dimension_numbers = #tpu.dot_dimension_numbers<[1], [0], [0], [1], [0, 0, 1, 1], [], []>} : vector<16x16xf32>, vector<16x8xf32>, vector<16x8xf32> -> vector<16x8xf32>
    %296 = vector.extract_strided_slice %222 {offsets = [16, 0], sizes = [8, 32], strides = [1, 1]} : vector<32x32xf32> to vector<8x32xf32>
    %cst_87 = arith.constant dense<0.000000e+00> : vector<16x32xf32>
    %297 = tpu.matmul %295, %296, %cst_87 {dimension_numbers = #tpu.dot_dimension_numbers<[1], [0], [0], [1], [0, 0, 1, 1], [], []>} : vector<16x8xf32>, vector<8x32xf32>, vector<16x32xf32> -> vector<16x32xf32>
    %298 = arith.addf %275, %297 : vector<16x32xf32>
    %299 = vector.extract_strided_slice %225 {offsets = [0, 24], sizes = [16, 8], strides = [1, 1]} : vector<16x32xf32> to vector<16x8xf32>
    %300 = vector.extract_strided_slice %227 {offsets = [24, 0], sizes = [8, 16], strides = [1, 1]} : vector<32x16xf32> to vector<8x16xf32>
    %cst_88 = arith.constant dense<0.000000e+00> : vector<16x16xf32>
    %301 = tpu.matmul %299, %300, %cst_88 {dimension_numbers = #tpu.dot_dimension_numbers<[1], [0], [0], [1], [0, 0, 1, 1], [], []>} : vector<16x8xf32>, vector<8x16xf32>, vector<16x16xf32> -> vector<16x16xf32>
    %302 = arith.addf %301, %10 : vector<16x16xf32>
    %cst_89 = arith.constant dense<0xFF800000> : vector<16xf32>
    %303 = vector.multi_reduction <maximumf>, %302, %cst_89 [1] : vector<16x16xf32> to vector<16xf32>
    %304 = vector.shape_cast %303 : vector<16xf32> to vector<16x1xf32>
    %305 = vector.broadcast %304 : vector<16x1xf32> to vector<16x16xf32>
    %306 = arith.subf %302, %305 : vector<16x16xf32>
    %307 = math.exp %306 : vector<16x16xf32>
    %cst_90 = arith.constant dense<0.000000e+00> : vector<16xf32>
    %308 = vector.multi_reduction <add>, %307, %cst_90 [1] : vector<16x16xf32> to vector<16xf32>
    %309 = vector.shape_cast %308 : vector<16xf32> to vector<16x1xf32>
    %310 = tpu.reciprocal %309 {approx = true} : vector<16x1xf32> -> vector<16x1xf32>
    %311 = arith.mulf %309, %310 : vector<16x1xf32>
    %cst_91 = arith.constant 2.000000e+00 : f32
    %312 = vector.broadcast %cst_91 : f32 to vector<16x1xf32>
    %313 = arith.subf %312, %311 : vector<16x1xf32>
    %314 = arith.mulf %310, %313 : vector<16x1xf32>
    %315 = vector.broadcast %314 : vector<16x1xf32> to vector<16x16xf32>
    %316 = arith.mulf %307, %315 : vector<16x16xf32>
    %317 = vector.extract_strided_slice %228 {offsets = [0, 24], sizes = [16, 8], strides = [1, 1]} : vector<16x32xf32> to vector<16x8xf32>
    %cst_92 = arith.constant dense<0.000000e+00> : vector<16x8xf32>
    %318 = tpu.matmul %316, %317, %cst_92 {dimension_numbers = #tpu.dot_dimension_numbers<[1], [0], [0], [1], [0, 0, 1, 1], [], []>} : vector<16x16xf32>, vector<16x8xf32>, vector<16x8xf32> -> vector<16x8xf32>
    %319 = vector.extract_strided_slice %222 {offsets = [24, 0], sizes = [8, 32], strides = [1, 1]} : vector<32x32xf32> to vector<8x32xf32>
    %cst_93 = arith.constant dense<0.000000e+00> : vector<16x32xf32>
    %320 = tpu.matmul %318, %319, %cst_93 {dimension_numbers = #tpu.dot_dimension_numbers<[1], [0], [0], [1], [0, 0, 1, 1], [], []>} : vector<16x8xf32>, vector<8x32xf32>, vector<16x32xf32> -> vector<16x32xf32>
    %321 = arith.addf %298, %320 : vector<16x32xf32>
    %322 = vector.broadcast %223 : vector<1x32xf32> to vector<16x32xf32>
    %323 = arith.addf %321, %322 : vector<16x32xf32>
    %cst_94 = arith.constant 0.000000e+00 : f32
    %324 = vector.broadcast %cst_94 : f32 to vector<16x32xf32>
    %325 = arith.maximumf %323, %324 : vector<16x32xf32>
    %c376 = arith.constant 376 : index
    %c0_95 = arith.constant 0 : index
    %326 = vector.load %arg1[%c376, %c0_95] : memref<416x128xf32, #tpu.memory_space<vmem>>, vector<32x128xf32>
    %c408 = arith.constant 408 : index
    %c0_96 = arith.constant 0 : index
    %327 = vector.load %arg1[%c408, %c0_96] : memref<416x128xf32, #tpu.memory_space<vmem>>, vector<1x128xf32>
    %cst_97 = arith.constant dense<0.000000e+00> : vector<16x128xf32>
    %328 = tpu.matmul %325, %326, %cst_97 {dimension_numbers = #tpu.dot_dimension_numbers<[1], [0], [0], [1], [0, 0, 1, 1], [], []>} : vector<16x32xf32>, vector<32x128xf32>, vector<16x128xf32> -> vector<16x128xf32>
    %329 = vector.broadcast %327 : vector<1x128xf32> to vector<16x128xf32>
    %330 = arith.addf %328, %329 : vector<16x128xf32>
    %c0_98 = arith.constant 0 : index
    %c0_99 = arith.constant 0 : index
    %331 = vector.load %arg2[%c0_98, %c0_99] : memref<16x128xf32, #tpu.memory_space<vmem>>, vector<16x128xf32>
    tpu.vector_store %arg2[%c0_98, %c0_99], %330 {strides = array<i32>} : memref<16x128xf32, #tpu.memory_space<vmem>>, vector<16x128xf32>,
    return
  }
}

</mosaic_0001>

<llo_original>
// kernel: bigram_lm_forward.1
$region0: #{bigram_lm_forward.1}
  #allocation0 [shape = 'u32[]', space=smem, size = 0x4, offset = 0x4, fixed_abs, tag = 'smem constant byte address 0x4 - core index']
  #allocation1 [shape = 'u32[72,128]{1,0:T(1,128)}', space=vmem, size = 0x9000, scoped, tag = 'internal scratch']
  %s0 = inlined_call_operand.vmem [shape: s32[16,1], index: 0, kind: input, shape index: {}]
  %s1 = inlined_call_operand.hbm [shape: f32[416,128], index: 1, kind: input, shape index: {}]
  %s2 = inlined_call_operand.vmem [shape: f32[16,128], index: 2, kind: output, shape index: {}]
  %s3 = sld [smem:[#allocation0]]
  $region22: #{bigram_lm_forward.1} parent=0
    _
  %s5 = ssub.s32 1, %s3
  %s6 = scalar_select 0, %s5, %s3
  $region1: #{bigram_lm_forward.1} parent=0
    #allocation2 [shape = 'u8[212992]{0}', space=vmem, size = 0x34000, scoped, tag = 'input window, operand 1, single buffered']
    #allocation3 [shape = 's32[1]{0}', space=sflag, size = 0x4, scoped, tag = 'scoped memory for bigram_lm_forward.1']
    %7 = vsyncpa [#allocation3], 0
    // Predicated region
    $region2: #{bigram_lm_forward.1} parent=1 // pred_check
      _
    $region3: #{bigram_lm_forward.1} parent=1 // pred_check_branch
      %9 = sbr.rel (0) target = $region5
    $region4: #{bigram_lm_forward.1} parent=1 // pred_region
      _
    $region5: #{bigram_lm_forward.1} parent=1 // pred_fallthru
      _
    // Predicated region
    $region6: #{bigram_lm_forward.1} parent=1 // pred_check
      _
    $region7: #{bigram_lm_forward.1} parent=1 // pred_check_branch
      %11 = sbr.rel (0) target = $region9
    $region8: #{bigram_lm_forward.1} parent=1 // pred_region
      %13 = vsyncadd [#allocation3], 0
      %s14 = sshll.u32 %s1, 4
      %s15 = int_to_ptr.hbm [resolvable:$true] %s14
      %s16 = sshll.u32 [#allocation2], 4
      %s17 = int_to_ptr.vmem [resolvable:$true] %s16
      %22 = dma.hbm_to_vmem [thread:$0]  %s15, 6656, %s17, [#allocation3], 128, 128, 8
    $region9: #{bigram_lm_forward.1} parent=1 // pred_fallthru
      _
    // Predicated region
    $region10: #{bigram_lm_forward.1} parent=1 // pred_check
      _
    $region11: #{bigram_lm_forward.1} parent=1 // pred_check_branch
      %24 = sbr.rel (0) target = $region13
    $region12: #{bigram_lm_forward.1} parent=1 // pred_region
      %26 = dma.done [#allocation3], 6656
    $region13: #{bigram_lm_forward.1} parent=1 // pred_fallthru
      _
    %v27 = vld [vmem:[%s0] sm:$0xff]
    %v28 = vld [vmem:[%s0 + $0x8] sm:$0xff]
    %v29 = vlaneseq
    %v30 = vand.u32 %v29, 127
    %31 = vset.pattern.permute.xlu0 0
    %32 = vperm.xlu0 %31, %v27
    %v33 = vpop.permute.xlu0 %32
    %34 = vset.pattern.permute.xlu0 0
    %35 = vperm.xlu0 %34, %v28
    %v36 = vpop.permute.xlu0 %35
    %vm37 = vcmp.eq.s32.totalorder %v33, %v30
    %vm38 = vcmp.eq.s32.totalorder %v36, %v30
    %v39 = vsel %vm37, 1, 0
    %v40 = vsel %vm38, 1, 0
    %v41 = vcvt.s32.f32 %v39
    %v42 = vcvt.s32.f32 %v40
    %v43 = vld [vmem:[#allocation2] sm:$0xff]
    %v44 = vld [vmem:[#allocation2 + $0x8] sm:$0xff]
    %v45 = vld [vmem:[#allocation2 + $0x10] sm:$0xff]
    %v46 = vld [vmem:[#allocation2 + $0x18] sm:$0xff]
    %v47 = vld [vmem:[#allocation2 + $0x20] sm:$0xff]
    %v48 = vld [vmem:[#allocation2 + $0x28] sm:$0xff]
    %v49 = vld [vmem:[#allocation2 + $0x30] sm:$0xff]
    %v50 = vld [vmem:[#allocation2 + $0x38] sm:$0xff]
    %v51 = vld [vmem:[#allocation2 + $0x40] sm:$0xff]
    %v52 = vld [vmem:[#allocation2 + $0x48] sm:$0xff]
    %v53 = vld [vmem:[#allocation2 + $0x50] sm:$0xff]
    %v54 = vld [vmem:[#allocation2 + $0x58] sm:$0xff]
    %v55 = vld [vmem:[#allocation2 + $0x60] sm:$0xff]
    %v56 = vld [vmem:[#allocation2 + $0x68] sm:$0xff]
    %v57 = vld [vmem:[#allocation2 + $0x70] sm:$0xff]
    %v58 = vld [vmem:[#allocation2 + $0x78] sm:$0xff]
    %v59 = vld [vmem:[#allocation2 + $0x80] sm:$0xff]
    %v60 = vld [vmem:[#allocation2 + $0x88] sm:$0xff]
    %61 = vmatpush.msra.mxu0 %v58
    %62 = vmatpush.msra.mxu0 %v57
    %63 = vmatpush.msra.mxu0 %v56
    %64 = vmatpush.msra.mxu0 %v55
    %65 = vmatpush.msra.mxu0 %v54
    %66 = vmatpush.msra.mxu0 %v53
    %67 = vmatpush.msra.mxu0 %v52
    %68 = vmatpush.msra.mxu0 %v51
    %69 = vmatpush.msra.mxu0 %v50
    %70 = vmatpush.msra.mxu0 %v49
    %71 = vmatpush.msra.mxu0 %v48
    %72 = vmatpush.msra.mxu0 %v47
    %73 = vmatpush.msra.mxu0 %v46
    %74 = vmatpush.msra.mxu0 %v45
    %75 = vmatpush.msra.mxu0 %v44
    %76 = vmatpush.msra.mxu0 %v43
    %77 = vmatmul.f32.gmra.mxu0 %v41
    %v78 = vpop.f32.mrf.mxu0
    %v79 = vadd.f32 %v59, %v78
    %80 = vmatmul.f32.gmra.mxu0 %v42
    %v81 = vpop.f32.mrf.mxu0
    %v82 = vadd.f32 %v60, %v81
    %83 = vdwg.mxu0
    %v84 = vld [vmem:[#allocation2 + $0x90] sm:$0xff]
    %v85 = vld [vmem:[#allocation2 + $0x98] sm:$0xff]
    %v86 = vld [vmem:[#allocation2 + $0xa0] sm:$0xff]
    %v87 = vld [vmem:[#allocation2 + $0xa8] sm:$0xff]
    %v88 = vld [vmem:[#allocation2 + $0xb0] sm:$0xff]
    %v89 = vld [vmem:[#allocation2 + $0xb8] sm:$0xff]
    %v90 = vld [vmem:[#allocation2 + $0x100] sm:$0xff]
    %v91 = vld [vmem:[#allocation2 + $0x108] sm:$0xff]
    %v92 = vld [vmem:[#allocation2 + $0x110] sm:$0xff]
    %v93 = vld [vmem:[#allocation2 + $0x118] sm:$0xff]
    %v94 = vld [vmem:[#allocation2 + $0x160] sm:$0x1]
    %vm95 = vcmask 261120
    %v97 = vsel %vm95, %v79, 0
    %v100 = vsel %vm95, %v82, 0
    %102 = vmatpush.msra.mxu0 0.0
    %103 = vmatpush.msra.mxu0 0.0
    %104 = vmatpush.msra.mxu0 0.0
    %105 = vmatpush.msra.mxu0 0.0
    %106 = vmatpush.msra.mxu0 0.0
    %107 = vmatpush.msra.mxu0 0.0
    %108 = vmatpush.msra.mxu0 0.0
    %109 = vmatpush.msra.mxu0 0.0
    %110 = vmatpush.msra.mxu0 0.0
    %111 = vmatpush.msra.mxu0 0.0
    %112 = vmatpush.msra.mxu0 0.0
    %113 = vmatpush.msra.mxu0 0.0
    %114 = vmatpush.msra.mxu0 %v89
    %115 = vmatpush.msra.mxu0 %v88
    %116 = vmatpush.msra.mxu0 %v87
    %117 = vmatpush.msra.mxu0 %v86
    %118 = vmatmul.f32.gmra.mxu0 %v97
    %v119 = vpop.f32.mrf.mxu0
    %v120 = vadd.f32 0.0, %v119
    %121 = vmatmul.f32.gmra.mxu0 %v100
    %v122 = vpop.f32.mrf.mxu0
    %v123 = vadd.f32 0.0, %v122
    %124 = vdwg.mxu0
    %127 = vrot.lane.b32.xlu0 %v120, 96
    %v128 = vpop.permute.xlu0 %127
    %129 = vrot.lane.b32.xlu0 %v123, 96
    %v130 = vpop.permute.xlu0 %129
    %vm131 = vcmask 64512
    %v132 = vsel %vm131, %v120, 0
    %v134 = vsel %vm131, %v123, 0
    %v136 = vsel %vm131, %v128, 0
    %v138 = vsel %vm131, %v130, 0
    %140 = vmatpush.xpose.msra.mxu0 0.0
    %141 = vmatpush.xpose.msra.mxu0 0.0
    %142 = vmatpush.xpose.msra.mxu0 0.0
    %143 = vmatpush.xpose.msra.mxu0 0.0
    %144 = vmatpush.xpose.msra.mxu0 0.0
    %145 = vmatpush.xpose.msra.mxu0 0.0
    %146 = vmatpush.xpose.msra.mxu0 0.0
    %147 = vmatpush.xpose.msra.mxu0 0.0
    %148 = vmatpush.xpose.msra.mxu0 0.0
    %149 = vmatpush.xpose.msra.mxu0 0.0
    %150 = vmatpush.xpose.msra.mxu0 0.0
    %151 = vmatpush.xpose.msra.mxu0 0.0
    %152 = vmatpush.xpose.msra.mxu0 0.0
    %153 = vmatpush.xpose.msra.mxu0 0.0
    %154 = vmatpush.xpose.msra.mxu0 %v138
    %155 = vmatpush.xpose.msra.mxu0 %v136
    %156 = vmatmul.f32.gmra.mxu0 %v132
    %v157 = vpop.f32.mrf.mxu0
    %v158 = vadd.f32 %v84, %v157
    %159 = vmatmul.f32.gmra.mxu0 %v134
    %v160 = vpop.f32.mrf.mxu0
    %v161 = vadd.f32 %v85, %v160
    %162 = vdwg.mxu0
    %vm163 = vcmask 130048
    %v164 = vsel %vm163, %v158, -inf
    %165 = vmax.xlane.f32.xlu0 %v164
    %v166 = vpop.xlane.xlu0 %165
    %v167 = vsel %vm163, %v161, -inf
    %168 = vmax.xlane.f32.xlu0 %v167
    %v169 = vpop.xlane.xlu0 %168
    %v170 = vsub.f32 %v158, %v166
    %v171 = vsub.f32 %v161, %v169
    %v172 = vmul.f32 %v170, 1.442695
    %v173 = vpow.pop %v172
    %v174 = vmul.f32 %v171, 1.442695
    %v175 = vpow.pop %v174
    %v176 = vsel %vm163, %v173, 0.0
    %177 = vadd.xlane.f32.xlu0 %v176
    %v178 = vpop.xlane.xlu0 %177
    %v179 = vsel %vm163, %v175, 0.0
    %180 = vadd.xlane.f32.xlu0 %v179
    %v181 = vpop.xlane.xlu0 %180
    %v182 = vrcp.pop %v178
    %v183 = vrcp.pop %v181
    %v184 = vmul.f32 %v178, %v182
    %v185 = vmul.f32 %v181, %v183
    %v186 = vsub.f32 2.0, %v184
    %v187 = vsub.f32 2.0, %v185
    %v188 = vmul.f32 %v182, %v186
    %v189 = vmul.f32 %v183, %v187
    %v190 = vmul.f32 %v173, %v188
    %v191 = vmul.f32 %v175, %v189
    %192 = vrot.lane.b32.xlu0 %v120, 64
    %v193 = vpop.permute.xlu0 %192
    %194 = vrot.lane.b32.xlu0 %v123, 64
    %v195 = vpop.permute.xlu0 %194
    %v199 = vsel %vm163, %v190, 0
    %v202 = vsel %vm163, %v191, 0
    %204 = vmatpush.msra.mxu0 0.0
    %205 = vmatpush.msra.mxu0 0.0
    %206 = vmatpush.msra.mxu0 0.0
    %207 = vmatpush.msra.mxu0 0.0
    %208 = vmatpush.msra.mxu0 0.0
    %209 = vmatpush.msra.mxu0 0.0
    %210 = vmatpush.msra.mxu0 0.0
    %211 = vmatpush.msra.mxu0 0.0
    %212 = vmatpush.msra.mxu0 0.0
    %213 = vmatpush.msra.mxu0 0.0
    %214 = vmatpush.msra.mxu0 0.0
    %215 = vmatpush.msra.mxu0 0.0
    %216 = vmatpush.msra.mxu0 0.0
    %217 = vmatpush.msra.mxu0 0.0
    %218 = vmatpush.msra.mxu0 %v195
    %219 = vmatpush.msra.mxu0 %v193
    %220 = vmatmul.f32.gmra.mxu0 %v199
    %v221 = vpop.f32.mrf.mxu0
    %v222 = vadd.f32 0.0, %v221
    %223 = vmatmul.f32.gmra.mxu0 %v202
    %v224 = vpop.f32.mrf.mxu0
    %v225 = vadd.f32 0.0, %v224
    %226 = vdwg.mxu0
    %227 = vrot.lane.b32.xlu0 %v120, 120
    %v228 = vpop.permute.xlu0 %227
    %229 = vrot.lane.b32.xlu0 %v123, 120
    %v230 = vpop.permute.xlu0 %229
    %231 = vrot.lane.b32.xlu0 %v120, 88
    %v232 = vpop.permute.xlu0 %231
    %233 = vrot.lane.b32.xlu0 %v123, 88
    %v234 = vpop.permute.xlu0 %233
    %v235 = vsel %vm131, %v228, 0
    %v237 = vsel %vm131, %v230, 0
    %v239 = vsel %vm131, %v232, 0
    %v241 = vsel %vm131, %v234, 0
    %243 = vmatpush.xpose.msra.mxu0 0.0
    %244 = vmatpush.xpose.msra.mxu0 0.0
    %245 = vmatpush.xpose.msra.mxu0 0.0
    %246 = vmatpush.xpose.msra.mxu0 0.0
    %247 = vmatpush.xpose.msra.mxu0 0.0
    %248 = vmatpush.xpose.msra.mxu0 0.0
    %249 = vmatpush.xpose.msra.mxu0 0.0
    %250 = vmatpush.xpose.msra.mxu0 0.0
    %251 = vmatpush.xpose.msra.mxu0 0.0
    %252 = vmatpush.xpose.msra.mxu0 0.0
    %253 = vmatpush.xpose.msra.mxu0 0.0
    %254 = vmatpush.xpose.msra.mxu0 0.0
    %255 = vmatpush.xpose.msra.mxu0 0.0
    %256 = vmatpush.xpose.msra.mxu0 0.0
    %257 = vmatpush.xpose.msra.mxu0 %v241
    %258 = vmatpush.xpose.msra.mxu0 %v239
    %259 = vmatmul.f32.gmra.mxu0 %v235
    %v260 = vpop.f32.mrf.mxu0
    %v261 = vadd.f32 %v84, %v260
    %262 = vmatmul.f32.gmra.mxu0 %v237
    %v263 = vpop.f32.mrf.mxu0
    %v264 = vadd.f32 %v85, %v263
    %265 = vdwg.mxu0
    %v266 = vsel %vm163, %v261, -inf
    %267 = vmax.xlane.f32.xlu0 %v266
    %v268 = vpop.xlane.xlu0 %267
    %v269 = vsel %vm163, %v264, -inf
    %270 = vmax.xlane.f32.xlu0 %v269
    %v271 = vpop.xlane.xlu0 %270
    %v272 = vsub.f32 %v261, %v268
    %v273 = vsub.f32 %v264, %v271
    %v274 = vmul.f32 %v272, 1.442695
    %v275 = vpow.pop %v274
    %v276 = vmul.f32 %v273, 1.442695
    %v277 = vpow.pop %v276
    %v278 = vsel %vm163, %v275, 0.0
    %279 = vadd.xlane.f32.xlu0 %v278
    %v280 = vpop.xlane.xlu0 %279
    %v281 = vsel %vm163, %v277, 0.0
    %282 = vadd.xlane.f32.xlu0 %v281
    %v283 = vpop.xlane.xlu0 %282
    %v284 = vrcp.pop %v280
    %v285 = vrcp.pop %v283
    %v286 = vmul.f32 %v280, %v284
    %v287 = vmul.f32 %v283, %v285
    %v288 = vsub.f32 2.0, %v286
    %v289 = vsub.f32 2.0, %v287
    %v290 = vmul.f32 %v284, %v288
    %v291 = vmul.f32 %v285, %v289
    %v292 = vmul.f32 %v275, %v290
    %v293 = vmul.f32 %v277, %v291
    %294 = vrot.lane.b32.xlu0 %v120, 56
    %v295 = vpop.permute.xlu0 %294
    %296 = vrot.lane.b32.xlu0 %v123, 56
    %v297 = vpop.permute.xlu0 %296
    %v301 = vsel %vm163, %v292, 0
    %v304 = vsel %vm163, %v293, 0
    %306 = vmatpush.msra.mxu0 0.0
    %307 = vmatpush.msra.mxu0 0.0
    %308 = vmatpush.msra.mxu0 0.0
    %309 = vmatpush.msra.mxu0 0.0
    %310 = vmatpush.msra.mxu0 0.0
    %311 = vmatpush.msra.mxu0 0.0
    %312 = vmatpush.msra.mxu0 0.0
    %313 = vmatpush.msra.mxu0 0.0
    %314 = vmatpush.msra.mxu0 0.0
    %315 = vmatpush.msra.mxu0 0.0
    %316 = vmatpush.msra.mxu0 0.0
    %317 = vmatpush.msra.mxu0 0.0
    %318 = vmatpush.msra.mxu0 0.0
    %319 = vmatpush.msra.mxu0 0.0
    %320 = vmatpush.msra.mxu0 %v297
    %321 = vmatpush.msra.mxu0 %v295
    %322 = vmatmul.f32.gmra.mxu0 %v301
    %v323 = vpop.f32.mrf.mxu0
    %v324 = vadd.f32 0.0, %v323
    %325 = vmatmul.f32.gmra.mxu0 %v304
    %v326 = vpop.f32.mrf.mxu0
    %v327 = vadd.f32 0.0, %v326
    %328 = vdwg.mxu0
    %v330 = vsel %vm131, %v324, 0
    %v333 = vsel %vm131, %v327, 0
    %335 = vmatpush.msra.mxu0 0.0
    %336 = vmatpush.msra.mxu0 0.0
    %337 = vmatpush.msra.mxu0 0.0
    %338 = vmatpush.msra.mxu0 0.0
    %339 = vmatpush.msra.mxu0 0.0
    %340 = vmatpush.msra.mxu0 0.0
    %341 = vmatpush.msra.mxu0 0.0
    %342 = vmatpush.msra.mxu0 0.0
    %343 = vmatpush.msra.mxu0 0.0
    %344 = vmatpush.msra.mxu0 0.0
    %345 = vmatpush.msra.mxu0 0.0
    %346 = vmatpush.msra.mxu0 0.0
    %347 = vmatpush.msra.mxu0 0.0
    %348 = vmatpush.msra.mxu0 0.0
    %349 = vmatpush.msra.mxu0 0.0
    %350 = vmatpush.msra.mxu0 %v91
    %351 = vmatmul.f32.gmra.mxu0 %v330
    %v352 = vpop.f32.mrf.mxu0
    %v353 = vadd.f32 0.0, %v352
    %354 = vmatmul.f32.gmra.mxu0 %v333
    %v355 = vpop.f32.mrf.mxu0
    %v356 = vadd.f32 0.0, %v355
    %357 = vdwg.mxu0
    %v359 = vsel %vm131, %v222, 0
    %v362 = vsel %vm131, %v225, 0
    %364 = vmatpush.msra.mxu0 0.0
    %365 = vmatpush.msra.mxu0 0.0
    %366 = vmatpush.msra.mxu0 0.0
    %367 = vmatpush.msra.mxu0 0.0
    %368 = vmatpush.msra.mxu0 0.0
    %369 = vmatpush.msra.mxu0 0.0
    %370 = vmatpush.msra.mxu0 0.0
    %371 = vmatpush.msra.mxu0 0.0
    %372 = vmatpush.msra.mxu0 0.0
    %373 = vmatpush.msra.mxu0 0.0
    %374 = vmatpush.msra.mxu0 0.0
    %375 = vmatpush.msra.mxu0 0.0
    %376 = vmatpush.msra.mxu0 0.0
    %377 = vmatpush.msra.mxu0 0.0
    %378 = vmatpush.msra.mxu0 0.0
    %379 = vmatpush.msra.mxu0 %v90
    %380 = vmatmul.f32.gmra.mxu0 %v359
    %v381 = vpop.f32.mrf.mxu0
    %v382 = vadd.f32 %v353, %v381
    %383 = vmatmul.f32.gmra.mxu0 %v362
    %v384 = vpop.f32.mrf.mxu0
    %v385 = vadd.f32 %v356, %v384
    %386 = vdwg.mxu0
    %387 = vrot.lane.b32.xlu0 %v120, 112
    %v388 = vpop.permute.xlu0 %387
    %389 = vrot.lane.b32.xlu0 %v123, 112
    %v390 = vpop.permute.xlu0 %389
    %391 = vrot.lane.b32.xlu0 %v120, 80
    %v392 = vpop.permute.xlu0 %391
    %393 = vrot.lane.b32.xlu0 %v123, 80
    %v394 = vpop.permute.xlu0 %393
    %v395 = vsel %vm131, %v388, 0
    %v397 = vsel %vm131, %v390, 0
    %v399 = vsel %vm131, %v392, 0
    %v401 = vsel %vm131, %v394, 0
    %403 = vmatpush.xpose.msra.mxu0 0.0
    %404 = vmatpush.xpose.msra.mxu0 0.0
    %405 = vmatpush.xpose.msra.mxu0 0.0
    %406 = vmatpush.xpose.msra.mxu0 0.0
    %407 = vmatpush.xpose.msra.mxu0 0.0
    %408 = vmatpush.xpose.msra.mxu0 0.0
    %409 = vmatpush.xpose.msra.mxu0 0.0
    %410 = vmatpush.xpose.msra.mxu0 0.0
    %411 = vmatpush.xpose.msra.mxu0 0.0
    %412 = vmatpush.xpose.msra.mxu0 0.0
    %413 = vmatpush.xpose.msra.mxu0 0.0
    %414 = vmatpush.xpose.msra.mxu0 0.0
    %415 = vmatpush.xpose.msra.mxu0 0.0
    %416 = vmatpush.xpose.msra.mxu0 0.0
    %417 = vmatpush.xpose.msra.mxu0 %v401
    %418 = vmatpush.xpose.msra.mxu0 %v399
    %419 = vmatmul.f32.gmra.mxu0 %v395
    %v420 = vpop.f32.mrf.mxu0
    %v421 = vadd.f32 %v84, %v420
    %422 = vmatmul.f32.gmra.mxu0 %v397
    %v423 = vpop.f32.mrf.mxu0
    %v424 = vadd.f32 %v85, %v423
    %425 = vdwg.mxu0
    %v426 = vsel %vm163, %v421, -inf
    %427 = vmax.xlane.f32.xlu0 %v426
    %v428 = vpop.xlane.xlu0 %427
    %v429 = vsel %vm163, %v424, -inf
    %430 = vmax.xlane.f32.xlu0 %v429
    %v431 = vpop.xlane.xlu0 %430
    %v432 = vsub.f32 %v421, %v428
    %v433 = vsub.f32 %v424, %v431
    %v434 = vmul.f32 %v432, 1.442695
    %v435 = vpow.pop %v434
    %v436 = vmul.f32 %v433, 1.442695
    %v437 = vpow.pop %v436
    %v438 = vsel %vm163, %v435, 0.0
    %439 = vadd.xlane.f32.xlu0 %v438
    %v440 = vpop.xlane.xlu0 %439
    %v441 = vsel %vm163, %v437, 0.0
    %442 = vadd.xlane.f32.xlu0 %v441
    %v443 = vpop.xlane.xlu0 %442
    %v444 = vrcp.pop %v440
    %v445 = vrcp.pop %v443
    %v446 = vmul.f32 %v440, %v444
    %v447 = vmul.f32 %v443, %v445
    %v448 = vsub.f32 2.0, %v446
    %v449 = vsub.f32 2.0, %v447
    %v450 = vmul.f32 %v444, %v448
    %v451 = vmul.f32 %v445, %v449
    %v452 = vmul.f32 %v435, %v450
    %v453 = vmul.f32 %v437, %v451
    %454 = vrot.lane.b32.xlu0 %v120, 48
    %v455 = vpop.permute.xlu0 %454
    %456 = vrot.lane.b32.xlu0 %v123, 48
    %v457 = vpop.permute.xlu0 %456
    %v461 = vsel %vm163, %v452, 0
    %v464 = vsel %vm163, %v453, 0
    %466 = vmatpush.msra.mxu0 0.0
    %467 = vmatpush.msra.mxu0 0.0
    %468 = vmatpush.msra.mxu0 0.0
    %469 = vmatpush.msra.mxu0 0.0
    %470 = vmatpush.msra.mxu0 0.0
    %471 = vmatpush.msra.mxu0 0.0
    %472 = vmatpush.msra.mxu0 0.0
    %473 = vmatpush.msra.mxu0 0.0
    %474 = vmatpush.msra.mxu0 0.0
    %475 = vmatpush.msra.mxu0 0.0
    %476 = vmatpush.msra.mxu0 0.0
    %477 = vmatpush.msra.mxu0 0.0
    %478 = vmatpush.msra.mxu0 0.0
    %479 = vmatpush.msra.mxu0 0.0
    %480 = vmatpush.msra.mxu0 %v457
    %481 = vmatpush.msra.mxu0 %v455
    %482 = vmatmul.f32.gmra.mxu0 %v461
    %v483 = vpop.f32.mrf.mxu0
    %v484 = vadd.f32 0.0, %v483
    %485 = vmatmul.f32.gmra.mxu0 %v464
    %v486 = vpop.f32.mrf.mxu0
    %v487 = vadd.f32 0.0, %v486
    %488 = vdwg.mxu0
    %v490 = vsel %vm131, %v484, 0
    %v493 = vsel %vm131, %v487, 0
    %495 = vmatpush.msra.mxu0 0.0
    %496 = vmatpush.msra.mxu0 0.0
    %497 = vmatpush.msra.mxu0 0.0
    %498 = vmatpush.msra.mxu0 0.0
    %499 = vmatpush.msra.mxu0 0.0
    %500 = vmatpush.msra.mxu0 0.0
    %501 = vmatpush.msra.mxu0 0.0
    %502 = vmatpush.msra.mxu0 0.0
    %503 = vmatpush.msra.mxu0 0.0
    %504 = vmatpush.msra.mxu0 0.0
    %505 = vmatpush.msra.mxu0 0.0
    %506 = vmatpush.msra.mxu0 0.0
    %507 = vmatpush.msra.mxu0 0.0
    %508 = vmatpush.msra.mxu0 0.0
    %509 = vmatpush.msra.mxu0 0.0
    %510 = vmatpush.msra.mxu0 %v92
    %511 = vmatmul.f32.gmra.mxu0 %v490
    %v512 = vpop.f32.mrf.mxu0
    %v513 = vadd.f32 0.0, %v512
    %514 = vmatmul.f32.gmra.mxu0 %v493
    %v515 = vpop.f32.mrf.mxu0
    %v516 = vadd.f32 0.0, %v515
    %517 = vdwg.mxu0
    %v518 = vadd.f32 %v382, %v513
    %v519 = vadd.f32 %v385, %v516
    %520 = vrot.lane.b32.xlu0 %v120, 104
    %v521 = vpop.permute.xlu0 %520
    %522 = vrot.lane.b32.xlu0 %v123, 104
    %v523 = vpop.permute.xlu0 %522
    %524 = vrot.lane.b32.xlu0 %v120, 72
    %v525 = vpop.permute.xlu0 %524
    %526 = vrot.lane.b32.xlu0 %v123, 72
    %v527 = vpop.permute.xlu0 %526
    %v528 = vsel %vm131, %v521, 0
    %v530 = vsel %vm131, %v523, 0
    %v532 = vsel %vm131, %v525, 0
    %v534 = vsel %vm131, %v527, 0
    %536 = vmatpush.xpose.msra.mxu0 0.0
    %537 = vmatpush.xpose.msra.mxu0 0.0
    %538 = vmatpush.xpose.msra.mxu0 0.0
    %539 = vmatpush.xpose.msra.mxu0 0.0
    %540 = vmatpush.xpose.msra.mxu0 0.0
    %541 = vmatpush.xpose.msra.mxu0 0.0
    %542 = vmatpush.xpose.msra.mxu0 0.0
    %543 = vmatpush.xpose.msra.mxu0 0.0
    %544 = vmatpush.xpose.msra.mxu0 0.0
    %545 = vmatpush.xpose.msra.mxu0 0.0
    %546 = vmatpush.xpose.msra.mxu0 0.0
    %547 = vmatpush.xpose.msra.mxu0 0.0
    %548 = vmatpush.xpose.msra.mxu0 0.0
    %549 = vmatpush.xpose.msra.mxu0 0.0
    %550 = vmatpush.xpose.msra.mxu0 %v534
    %551 = vmatpush.xpose.msra.mxu0 %v532
    %552 = vmatmul.f32.gmra.mxu0 %v528
    %v553 = vpop.f32.mrf.mxu0
    %v554 = vadd.f32 %v84, %v553
    %555 = vmatmul.f32.gmra.mxu0 %v530
    %v556 = vpop.f32.mrf.mxu0
    %v557 = vadd.f32 %v85, %v556
    %558 = vdwg.mxu0
    %v559 = vsel %vm163, %v554, -inf
    %560 = vmax.xlane.f32.xlu0 %v559
    %v561 = vpop.xlane.xlu0 %560
    %v562 = vsel %vm163, %v557, -inf
    %563 = vmax.xlane.f32.xlu0 %v562
    %v564 = vpop.xlane.xlu0 %563
    %v565 = vsub.f32 %v554, %v561
    %v566 = vsub.f32 %v557, %v564
    %v567 = vmul.f32 %v565, 1.442695
    %v568 = vpow.pop %v567
    %v569 = vmul.f32 %v566, 1.442695
    %v570 = vpow.pop %v569
    %v571 = vsel %vm163, %v568, 0.0
    %572 = vadd.xlane.f32.xlu0 %v571
    %v573 = vpop.xlane.xlu0 %572
    %v574 = vsel %vm163, %v570, 0.0
    %575 = vadd.xlane.f32.xlu0 %v574
    %v576 = vpop.xlane.xlu0 %575
    %v577 = vrcp.pop %v573
    %v578 = vrcp.pop %v576
    %v579 = vmul.f32 %v573, %v577
    %v580 = vmul.f32 %v576, %v578
    %v581 = vsub.f32 2.0, %v579
    %v582 = vsub.f32 2.0, %v580
    %v583 = vmul.f32 %v577, %v581
    %v584 = vmul.f32 %v578, %v582
    %v585 = vmul.f32 %v568, %v583
    %v586 = vmul.f32 %v570, %v584
    %587 = vrot.lane.b32.xlu0 %v120, 40
    %v588 = vpop.permute.xlu0 %587
    %589 = vrot.lane.b32.xlu0 %v123, 40
    %v590 = vpop.permute.xlu0 %589
    %v594 = vsel %vm163, %v585, 0
    %v597 = vsel %vm163, %v586, 0
    %599 = vmatpush.msra.mxu0 0.0
    %600 = vmatpush.msra.mxu0 0.0
    %601 = vmatpush.msra.mxu0 0.0
    %602 = vmatpush.msra.mxu0 0.0
    %603 = vmatpush.msra.mxu0 0.0
    %604 = vmatpush.msra.mxu0 0.0
    %605 = vmatpush.msra.mxu0 0.0
    %606 = vmatpush.msra.mxu0 0.0
    %607 = vmatpush.msra.mxu0 0.0
    %608 = vmatpush.msra.mxu0 0.0
    %609 = vmatpush.msra.mxu0 0.0
    %610 = vmatpush.msra.mxu0 0.0
    %611 = vmatpush.msra.mxu0 0.0
    %612 = vmatpush.msra.mxu0 0.0
    %613 = vmatpush.msra.mxu0 %v590
    %614 = vmatpush.msra.mxu0 %v588
    %615 = vmatmul.f32.gmra.mxu0 %v594
    %v616 = vpop.f32.mrf.mxu0
    %v617 = vadd.f32 0.0, %v616
    %618 = vmatmul.f32.gmra.mxu0 %v597
    %v619 = vpop.f32.mrf.mxu0
    %v620 = vadd.f32 0.0, %v619
    %621 = vdwg.mxu0
    %v623 = vsel %vm131, %v617, 0
    %v626 = vsel %vm131, %v620, 0
    %628 = vmatpush.msra.mxu0 0.0
    %629 = vmatpush.msra.mxu0 0.0
    %630 = vmatpush.msra.mxu0 0.0
    %631 = vmatpush.msra.mxu0 0.0
    %632 = vmatpush.msra.mxu0 0.0
    %633 = vmatpush.msra.mxu0 0.0
    %634 = vmatpush.msra.mxu0 0.0
    %635 = vmatpush.msra.mxu0 0.0
    %636 = vmatpush.msra.mxu0 0.0
    %637 = vmatpush.msra.mxu0 0.0
    %638 = vmatpush.msra.mxu0 0.0
    %639 = vmatpush.msra.mxu0 0.0
    %640 = vmatpush.msra.mxu0 0.0
    %641 = vmatpush.msra.mxu0 0.0
    %642 = vmatpush.msra.mxu0 0.0
    %643 = vmatpush.msra.mxu0 %v93
    %644 = vmatmul.f32.gmra.mxu0 %v623
    %v645 = vpop.f32.mrf.mxu0
    %v646 = vadd.f32 0.0, %v645
    %647 = vmatmul.f32.gmra.mxu0 %v626
    %v648 = vpop.f32.mrf.mxu0
    %v649 = vadd.f32 0.0, %v648
    %650 = vdwg.mxu0
    %v651 = vadd.f32 %v518, %v646
    %v652 = vadd.f32 %v519, %v649
    %v653 = vperm.slane %v94, 0
    %v654 = vadd.f32 %v651, %v653
    %v655 = vadd.f32 %v652, %v653
    %v656 = vmax.f32 %v654, 0.0
    %v657 = vmax.f32 %v655, 0.0
    %v658 = vld [vmem:[#allocation2 + $0xc0] sm:$0xff]
    %v659 = vld [vmem:[#allocation2 + $0xc8] sm:$0xff]
    %v660 = vld [vmem:[#allocation2 + $0xd0] sm:$0xff]
    %v661 = vld [vmem:[#allocation2 + $0xd8] sm:$0xff]
    %v662 = vld [vmem:[#allocation2 + $0x120] sm:$0xff]
    %v663 = vld [vmem:[#allocation2 + $0x128] sm:$0xff]
    %v664 = vld [vmem:[#allocation2 + $0x130] sm:$0xff]
    %v665 = vld [vmem:[#allocation2 + $0x138] sm:$0xff]
    %v666 = vld [vmem:[#allocation2 + $0x168] sm:$0x1]
    %v668 = vsel %vm95, %v656, 0
    %v671 = vsel %vm95, %v657, 0
    %673 = vmatpush.msra.mxu0 0.0
    %674 = vmatpush.msra.mxu0 0.0
    %675 = vmatpush.msra.mxu0 0.0
    %676 = vmatpush.msra.mxu0 0.0
    %677 = vmatpush.msra.mxu0 0.0
    %678 = vmatpush.msra.mxu0 0.0
    %679 = vmatpush.msra.mxu0 0.0
    %680 = vmatpush.msra.mxu0 0.0
    %681 = vmatpush.msra.mxu0 0.0
    %682 = vmatpush.msra.mxu0 0.0
    %683 = vmatpush.msra.mxu0 0.0
    %684 = vmatpush.msra.mxu0 0.0
    %685 = vmatpush.msra.mxu0 %v661
    %686 = vmatpush.msra.mxu0 %v660
    %687 = vmatpush.msra.mxu0 %v659
    %688 = vmatpush.msra.mxu0 %v658
    %689 = vmatmul.f32.gmra.mxu0 %v668
    %v690 = vpop.f32.mrf.mxu0
    %v691 = vadd.f32 0.0, %v690
    %692 = vmatmul.f32.gmra.mxu0 %v671
    %v693 = vpop.f32.mrf.mxu0
    %v694 = vadd.f32 0.0, %v693
    %695 = vdwg.mxu0
    %698 = vrot.lane.b32.xlu0 %v691, 96
    %v699 = vpop.permute.xlu0 %698
    %700 = vrot.lane.b32.xlu0 %v694, 96
    %v701 = vpop.permute.xlu0 %700
    %v702 = vsel %vm131, %v691, 0
    %v704 = vsel %vm131, %v694, 0
    %v706 = vsel %vm131, %v699, 0
    %v708 = vsel %vm131, %v701, 0
    %710 = vmatpush.xpose.msra.mxu0 0.0
    %711 = vmatpush.xpose.msra.mxu0 0.0
    %712 = vmatpush.xpose.msra.mxu0 0.0
    %713 = vmatpush.xpose.msra.mxu0 0.0
    %714 = vmatpush.xpose.msra.mxu0 0.0
    %715 = vmatpush.xpose.msra.mxu0 0.0
    %716 = vmatpush.xpose.msra.mxu0 0.0
    %717 = vmatpush.xpose.msra.mxu0 0.0
    %718 = vmatpush.xpose.msra.mxu0 0.0
    %719 = vmatpush.xpose.msra.mxu0 0.0
    %720 = vmatpush.xpose.msra.mxu0 0.0
    %721 = vmatpush.xpose.msra.mxu0 0.0
    %722 = vmatpush.xpose.msra.mxu0 0.0
    %723 = vmatpush.xpose.msra.mxu0 0.0
    %724 = vmatpush.xpose.msra.mxu0 %v708
    %725 = vmatpush.xpose.msra.mxu0 %v706
    %726 = vmatmul.f32.gmra.mxu0 %v702
    %v727 = vpop.f32.mrf.mxu0
    %v728 = vadd.f32 %v84, %v727
    %729 = vmatmul.f32.gmra.mxu0 %v704
    %v730 = vpop.f32.mrf.mxu0
    %v731 = vadd.f32 %v85, %v730
    %732 = vdwg.mxu0
    %v733 = vsel %vm163, %v728, -inf
    %734 = vmax.xlane.f32.xlu0 %v733
    %v735 = vpop.xlane.xlu0 %734
    %v736 = vsel %vm163, %v731, -inf
    %737 = vmax.xlane.f32.xlu0 %v736
    %v738 = vpop.xlane.xlu0 %737
    %v739 = vsub.f32 %v728, %v735
    %v740 = vsub.f32 %v731, %v738
    %v741 = vmul.f32 %v739, 1.442695
    %v742 = vpow.pop %v741
    %v743 = vmul.f32 %v740, 1.442695
    %v744 = vpow.pop %v743
    %v745 = vsel %vm163, %v742, 0.0
    %746 = vadd.xlane.f32.xlu0 %v745
    %v747 = vpop.xlane.xlu0 %746
    %v748 = vsel %vm163, %v744, 0.0
    %749 = vadd.xlane.f32.xlu0 %v748
    %v750 = vpop.xlane.xlu0 %749
    %v751 = vrcp.pop %v747
    %v752 = vrcp.pop %v750
    %v753 = vmul.f32 %v747, %v751
    %v754 = vmul.f32 %v750, %v752
    %v755 = vsub.f32 2.0, %v753
    %v756 = vsub.f32 2.0, %v754
    %v757 = vmul.f32 %v751, %v755
    %v758 = vmul.f32 %v752, %v756
    %v759 = vmul.f32 %v742, %v757
    %v760 = vmul.f32 %v744, %v758
    %761 = vrot.lane.b32.xlu0 %v691, 64
    %v762 = vpop.permute.xlu0 %761
    %763 = vrot.lane.b32.xlu0 %v694, 64
    %v764 = vpop.permute.xlu0 %763
    %v768 = vsel %vm163, %v759, 0
    %v771 = vsel %vm163, %v760, 0
    %773 = vmatpush.msra.mxu0 0.0
    %774 = vmatpush.msra.mxu0 0.0
    %775 = vmatpush.msra.mxu0 0.0
    %776 = vmatpush.msra.mxu0 0.0
    %777 = vmatpush.msra.mxu0 0.0
    %778 = vmatpush.msra.mxu0 0.0
    %779 = vmatpush.msra.mxu0 0.0
    %780 = vmatpush.msra.mxu0 0.0
    %781 = vmatpush.msra.mxu0 0.0
    %782 = vmatpush.msra.mxu0 0.0
    %783 = vmatpush.msra.mxu0 0.0
    %784 = vmatpush.msra.mxu0 0.0
    %785 = vmatpush.msra.mxu0 0.0
    %786 = vmatpush.msra.mxu0 0.0
    %787 = vmatpush.msra.mxu0 %v764
    %788 = vmatpush.msra.mxu0 %v762
    %789 = vmatmul.f32.gmra.mxu0 %v768
    %v790 = vpop.f32.mrf.mxu0
    %v791 = vadd.f32 0.0, %v790
    %792 = vmatmul.f32.gmra.mxu0 %v771
    %v793 = vpop.f32.mrf.mxu0
    %v794 = vadd.f32 0.0, %v793
    %795 = vdwg.mxu0
    %796 = vrot.lane.b32.xlu0 %v691, 120
    %v797 = vpop.permute.xlu0 %796
    %798 = vrot.lane.b32.xlu0 %v694, 120
    %v799 = vpop.permute.xlu0 %798
    %800 = vrot.lane.b32.xlu0 %v691, 88
    %v801 = vpop.permute.xlu0 %800
    %802 = vrot.lane.b32.xlu0 %v694, 88
    %v803 = vpop.permute.xlu0 %802
    %v804 = vsel %vm131, %v797, 0
    %v806 = vsel %vm131, %v799, 0
    %v808 = vsel %vm131, %v801, 0
    %v810 = vsel %vm131, %v803, 0
    %812 = vmatpush.xpose.msra.mxu0 0.0
    %813 = vmatpush.xpose.msra.mxu0 0.0
    %814 = vmatpush.xpose.msra.mxu0 0.0
    %815 = vmatpush.xpose.msra.mxu0 0.0
    %816 = vmatpush.xpose.msra.mxu0 0.0
    %817 = vmatpush.xpose.msra.mxu0 0.0
    %818 = vmatpush.xpose.msra.mxu0 0.0
    %819 = vmatpush.xpose.msra.mxu0 0.0
    %820 = vmatpush.xpose.msra.mxu0 0.0
    %821 = vmatpush.xpose.msra.mxu0 0.0
    %822 = vmatpush.xpose.msra.mxu0 0.0
    %823 = vmatpush.xpose.msra.mxu0 0.0
    %824 = vmatpush.xpose.msra.mxu0 0.0
    %825 = vmatpush.xpose.msra.mxu0 0.0
    %826 = vmatpush.xpose.msra.mxu0 %v810
    %827 = vmatpush.xpose.msra.mxu0 %v808
    %828 = vmatmul.f32.gmra.mxu0 %v804
    %v829 = vpop.f32.mrf.mxu0
    %v830 = vadd.f32 %v84, %v829
    %831 = vmatmul.f32.gmra.mxu0 %v806
    %v832 = vpop.f32.mrf.mxu0
    %v833 = vadd.f32 %v85, %v832
    %834 = vdwg.mxu0
    %v835 = vsel %vm163, %v830, -inf
    %836 = vmax.xlane.f32.xlu0 %v835
    %v837 = vpop.xlane.xlu0 %836
    %v838 = vsel %vm163, %v833, -inf
    %839 = vmax.xlane.f32.xlu0 %v838
    %v840 = vpop.xlane.xlu0 %839
    %v841 = vsub.f32 %v830, %v837
    %v842 = vsub.f32 %v833, %v840
    %v843 = vmul.f32 %v841, 1.442695
    %v844 = vpow.pop %v843
    %v845 = vmul.f32 %v842, 1.442695
    %v846 = vpow.pop %v845
    %v847 = vsel %vm163, %v844, 0.0
    %848 = vadd.xlane.f32.xlu0 %v847
    %v849 = vpop.xlane.xlu0 %848
    %v850 = vsel %vm163, %v846, 0.0
    %851 = vadd.xlane.f32.xlu0 %v850
    %v852 = vpop.xlane.xlu0 %851
    %v853 = vrcp.pop %v849
    %v854 = vrcp.pop %v852
    %v855 = vmul.f32 %v849, %v853
    %v856 = vmul.f32 %v852, %v854
    %v857 = vsub.f32 2.0, %v855
    %v858 = vsub.f32 2.0, %v856
    %v859 = vmul.f32 %v853, %v857
    %v860 = vmul.f32 %v854, %v858
    %v861 = vmul.f32 %v844, %v859
    %v862 = vmul.f32 %v846, %v860
    %863 = vrot.lane.b32.xlu0 %v691, 56
    %v864 = vpop.permute.xlu0 %863
    %865 = vrot.lane.b32.xlu0 %v694, 56
    %v866 = vpop.permute.xlu0 %865
    %v870 = vsel %vm163, %v861, 0
    %v873 = vsel %vm163, %v862, 0
    %875 = vmatpush.msra.mxu0 0.0
    %876 = vmatpush.msra.mxu0 0.0
    %877 = vmatpush.msra.mxu0 0.0
    %878 = vmatpush.msra.mxu0 0.0
    %879 = vmatpush.msra.mxu0 0.0
    %880 = vmatpush.msra.mxu0 0.0
    %881 = vmatpush.msra.mxu0 0.0
    %882 = vmatpush.msra.mxu0 0.0
    %883 = vmatpush.msra.mxu0 0.0
    %884 = vmatpush.msra.mxu0 0.0
    %885 = vmatpush.msra.mxu0 0.0
    %886 = vmatpush.msra.mxu0 0.0
    %887 = vmatpush.msra.mxu0 0.0
    %888 = vmatpush.msra.mxu0 0.0
    %889 = vmatpush.msra.mxu0 %v866
    %890 = vmatpush.msra.mxu0 %v864
    %891 = vmatmul.f32.gmra.mxu0 %v870
    %v892 = vpop.f32.mrf.mxu0
    %v893 = vadd.f32 0.0, %v892
    %894 = vmatmul.f32.gmra.mxu0 %v873
    %v895 = vpop.f32.mrf.mxu0
    %v896 = vadd.f32 0.0, %v895
    %897 = vdwg.mxu0
    %v899 = vsel %vm131, %v893, 0
    %v902 = vsel %vm131, %v896, 0
    %904 = vmatpush.msra.mxu0 0.0
    %905 = vmatpush.msra.mxu0 0.0
    %906 = vmatpush.msra.mxu0 0.0
    %907 = vmatpush.msra.mxu0 0.0
    %908 = vmatpush.msra.mxu0 0.0
    %909 = vmatpush.msra.mxu0 0.0
    %910 = vmatpush.msra.mxu0 0.0
    %911 = vmatpush.msra.mxu0 0.0
    %912 = vmatpush.msra.mxu0 0.0
    %913 = vmatpush.msra.mxu0 0.0
    %914 = vmatpush.msra.mxu0 0.0
    %915 = vmatpush.msra.mxu0 0.0
    %916 = vmatpush.msra.mxu0 0.0
    %917 = vmatpush.msra.mxu0 0.0
    %918 = vmatpush.msra.mxu0 0.0
    %919 = vmatpush.msra.mxu0 %v663
    %920 = vmatmul.f32.gmra.mxu0 %v899
    %v921 = vpop.f32.mrf.mxu0
    %v922 = vadd.f32 0.0, %v921
    %923 = vmatmul.f32.gmra.mxu0 %v902
    %v924 = vpop.f32.mrf.mxu0
    %v925 = vadd.f32 0.0, %v924
    %926 = vdwg.mxu0
    %v928 = vsel %vm131, %v791, 0
    %v931 = vsel %vm131, %v794, 0
    %933 = vmatpush.msra.mxu0 0.0
    %934 = vmatpush.msra.mxu0 0.0
    %935 = vmatpush.msra.mxu0 0.0
    %936 = vmatpush.msra.mxu0 0.0
    %937 = vmatpush.msra.mxu0 0.0
    %938 = vmatpush.msra.mxu0 0.0
    %939 = vmatpush.msra.mxu0 0.0
    %940 = vmatpush.msra.mxu0 0.0
    %941 = vmatpush.msra.mxu0 0.0
    %942 = vmatpush.msra.mxu0 0.0
    %943 = vmatpush.msra.mxu0 0.0
    %944 = vmatpush.msra.mxu0 0.0
    %945 = vmatpush.msra.mxu0 0.0
    %946 = vmatpush.msra.mxu0 0.0
    %947 = vmatpush.msra.mxu0 0.0
    %948 = vmatpush.msra.mxu0 %v662
    %949 = vmatmul.f32.gmra.mxu0 %v928
    %v950 = vpop.f32.mrf.mxu0
    %v951 = vadd.f32 %v922, %v950
    %952 = vmatmul.f32.gmra.mxu0 %v931
    %v953 = vpop.f32.mrf.mxu0
    %v954 = vadd.f32 %v925, %v953
    %955 = vdwg.mxu0
    %956 = vrot.lane.b32.xlu0 %v691, 112
    %v957 = vpop.permute.xlu0 %956
    %958 = vrot.lane.b32.xlu0 %v694, 112
    %v959 = vpop.permute.xlu0 %958
    %960 = vrot.lane.b32.xlu0 %v691, 80
    %v961 = vpop.permute.xlu0 %960
    %962 = vrot.lane.b32.xlu0 %v694, 80
    %v963 = vpop.permute.xlu0 %962
    %v964 = vsel %vm131, %v957, 0
    %v966 = vsel %vm131, %v959, 0
    %v968 = vsel %vm131, %v961, 0
    %v970 = vsel %vm131, %v963, 0
    %972 = vmatpush.xpose.msra.mxu0 0.0
    %973 = vmatpush.xpose.msra.mxu0 0.0
    %974 = vmatpush.xpose.msra.mxu0 0.0
    %975 = vmatpush.xpose.msra.mxu0 0.0
    %976 = vmatpush.xpose.msra.mxu0 0.0
    %977 = vmatpush.xpose.msra.mxu0 0.0
    %978 = vmatpush.xpose.msra.mxu0 0.0
    %979 = vmatpush.xpose.msra.mxu0 0.0
    %980 = vmatpush.xpose.msra.mxu0 0.0
    %981 = vmatpush.xpose.msra.mxu0 0.0
    %982 = vmatpush.xpose.msra.mxu0 0.0
    %983 = vmatpush.xpose.msra.mxu0 0.0
    %984 = vmatpush.xpose.msra.mxu0 0.0
    %985 = vmatpush.xpose.msra.mxu0 0.0
    %986 = vmatpush.xpose.msra.mxu0 %v970
    %987 = vmatpush.xpose.msra.mxu0 %v968
    %988 = vmatmul.f32.gmra.mxu0 %v964
    %v989 = vpop.f32.mrf.mxu0
    %v990 = vadd.f32 %v84, %v989
    %991 = vmatmul.f32.gmra.mxu0 %v966
    %v992 = vpop.f32.mrf.mxu0
    %v993 = vadd.f32 %v85, %v992
    %994 = vdwg.mxu0
    %v995 = vsel %vm163, %v990, -inf
    %996 = vmax.xlane.f32.xlu0 %v995
    %v997 = vpop.xlane.xlu0 %996
    %v998 = vsel %vm163, %v993, -inf
    %999 = vmax.xlane.f32.xlu0 %v998
    %v1000 = vpop.xlane.xlu0 %999
    %v1001 = vsub.f32 %v990, %v997
    %v1002 = vsub.f32 %v993, %v1000
    %v1003 = vmul.f32 %v1001, 1.442695
    %v1004 = vpow.pop %v1003
    %v1005 = vmul.f32 %v1002, 1.442695
    %v1006 = vpow.pop %v1005
    %v1007 = vsel %vm163, %v1004, 0.0
    %1008 = vadd.xlane.f32.xlu0 %v1007
    %v1009 = vpop.xlane.xlu0 %1008
    %v1010 = vsel %vm163, %v1006, 0.0
    %1011 = vadd.xlane.f32.xlu0 %v1010
    %v1012 = vpop.xlane.xlu0 %1011
    %v1013 = vrcp.pop %v1009
    %v1014 = vrcp.pop %v1012
    %v1015 = vmul.f32 %v1009, %v1013
    %v1016 = vmul.f32 %v1012, %v1014
    %v1017 = vsub.f32 2.0, %v1015
    %v1018 = vsub.f32 2.0, %v1016
    %v1019 = vmul.f32 %v1013, %v1017
    %v1020 = vmul.f32 %v1014, %v1018
    %v1021 = vmul.f32 %v1004, %v1019
    %v1022 = vmul.f32 %v1006, %v1020
    %1023 = vrot.lane.b32.xlu0 %v691, 48
    %v1024 = vpop.permute.xlu0 %1023
    %1025 = vrot.lane.b32.xlu0 %v694, 48
    %v1026 = vpop.permute.xlu0 %1025
    %v1030 = vsel %vm163, %v1021, 0
    %v1033 = vsel %vm163, %v1022, 0
    %1035 = vmatpush.msra.mxu0 0.0
    %1036 = vmatpush.msra.mxu0 0.0
    %1037 = vmatpush.msra.mxu0 0.0
    %1038 = vmatpush.msra.mxu0 0.0
    %1039 = vmatpush.msra.mxu0 0.0
    %1040 = vmatpush.msra.mxu0 0.0
    %1041 = vmatpush.msra.mxu0 0.0
    %1042 = vmatpush.msra.mxu0 0.0
    %1043 = vmatpush.msra.mxu0 0.0
    %1044 = vmatpush.msra.mxu0 0.0
    %1045 = vmatpush.msra.mxu0 0.0
    %1046 = vmatpush.msra.mxu0 0.0
    %1047 = vmatpush.msra.mxu0 0.0
    %1048 = vmatpush.msra.mxu0 0.0
    %1049 = vmatpush.msra.mxu0 %v1026
    %1050 = vmatpush.msra.mxu0 %v1024
    %1051 = vmatmul.f32.gmra.mxu0 %v1030
    %v1052 = vpop.f32.mrf.mxu0
    %v1053 = vadd.f32 0.0, %v1052
    %1054 = vmatmul.f32.gmra.mxu0 %v1033
    %v1055 = vpop.f32.mrf.mxu0
    %v1056 = vadd.f32 0.0, %v1055
    %1057 = vdwg.mxu0
    %v1059 = vsel %vm131, %v1053, 0
    %v1062 = vsel %vm131, %v1056, 0
    %1064 = vmatpush.msra.mxu0 0.0
    %1065 = vmatpush.msra.mxu0 0.0
    %1066 = vmatpush.msra.mxu0 0.0
    %1067 = vmatpush.msra.mxu0 0.0
    %1068 = vmatpush.msra.mxu0 0.0
    %1069 = vmatpush.msra.mxu0 0.0
    %1070 = vmatpush.msra.mxu0 0.0
    %1071 = vmatpush.msra.mxu0 0.0
    %1072 = vmatpush.msra.mxu0 0.0
    %1073 = vmatpush.msra.mxu0 0.0
    %1074 = vmatpush.msra.mxu0 0.0
    %1075 = vmatpush.msra.mxu0 0.0
    %1076 = vmatpush.msra.mxu0 0.0
    %1077 = vmatpush.msra.mxu0 0.0
    %1078 = vmatpush.msra.mxu0 0.0
    %1079 = vmatpush.msra.mxu0 %v664
    %1080 = vmatmul.f32.gmra.mxu0 %v1059
    %v1081 = vpop.f32.mrf.mxu0
    %v1082 = vadd.f32 0.0, %v1081
    %1083 = vmatmul.f32.gmra.mxu0 %v1062
    %v1084 = vpop.f32.mrf.mxu0
    %v1085 = vadd.f32 0.0, %v1084
    %1086 = vdwg.mxu0
    %v1087 = vadd.f32 %v951, %v1082
    %v1088 = vadd.f32 %v954, %v1085
    %1089 = vrot.lane.b32.xlu0 %v691, 104
    %v1090 = vpop.permute.xlu0 %1089
    %1091 = vrot.lane.b32.xlu0 %v694, 104
    %v1092 = vpop.permute.xlu0 %1091
    %1093 = vrot.lane.b32.xlu0 %v691, 72
    %v1094 = vpop.permute.xlu0 %1093
    %1095 = vrot.lane.b32.xlu0 %v694, 72
    %v1096 = vpop.permute.xlu0 %1095
    %v1097 = vsel %vm131, %v1090, 0
    %v1099 = vsel %vm131, %v1092, 0
    %v1101 = vsel %vm131, %v1094, 0
    %v1103 = vsel %vm131, %v1096, 0
    %1105 = vmatpush.xpose.msra.mxu0 0.0
    %1106 = vmatpush.xpose.msra.mxu0 0.0
    %1107 = vmatpush.xpose.msra.mxu0 0.0
    %1108 = vmatpush.xpose.msra.mxu0 0.0
    %1109 = vmatpush.xpose.msra.mxu0 0.0
    %1110 = vmatpush.xpose.msra.mxu0 0.0
    %1111 = vmatpush.xpose.msra.mxu0 0.0
    %1112 = vmatpush.xpose.msra.mxu0 0.0
    %1113 = vmatpush.xpose.msra.mxu0 0.0
    %1114 = vmatpush.xpose.msra.mxu0 0.0
    %1115 = vmatpush.xpose.msra.mxu0 0.0
    %1116 = vmatpush.xpose.msra.mxu0 0.0
    %1117 = vmatpush.xpose.msra.mxu0 0.0
    %1118 = vmatpush.xpose.msra.mxu0 0.0
    %1119 = vmatpush.xpose.msra.mxu0 %v1103
    %1120 = vmatpush.xpose.msra.mxu0 %v1101
    %1121 = vmatmul.f32.gmra.mxu0 %v1097
    %v1122 = vpop.f32.mrf.mxu0
    %v1123 = vadd.f32 %v84, %v1122
    %1124 = vmatmul.f32.gmra.mxu0 %v1099
    %v1125 = vpop.f32.mrf.mxu0
    %v1126 = vadd.f32 %v85, %v1125
    %1127 = vdwg.mxu0
    %v1128 = vsel %vm163, %v1123, -inf
    %1129 = vmax.xlane.f32.xlu0 %v1128
    %v1130 = vpop.xlane.xlu0 %1129
    %v1131 = vsel %vm163, %v1126, -inf
    %1132 = vmax.xlane.f32.xlu0 %v1131
    %v1133 = vpop.xlane.xlu0 %1132
    %v1134 = vsub.f32 %v1123, %v1130
    %v1135 = vsub.f32 %v1126, %v1133
    %v1136 = vmul.f32 %v1134, 1.442695
    %v1137 = vpow.pop %v1136
    %v1138 = vmul.f32 %v1135, 1.442695
    %v1139 = vpow.pop %v1138
    %v1140 = vsel %vm163, %v1137, 0.0
    %1141 = vadd.xlane.f32.xlu0 %v1140
    %v1142 = vpop.xlane.xlu0 %1141
    %v1143 = vsel %vm163, %v1139, 0.0
    %1144 = vadd.xlane.f32.xlu0 %v1143
    %v1145 = vpop.xlane.xlu0 %1144
    %v1146 = vrcp.pop %v1142
    %v1147 = vrcp.pop %v1145
    %v1148 = vmul.f32 %v1142, %v1146
    %v1149 = vmul.f32 %v1145, %v1147
    %v1150 = vsub.f32 2.0, %v1148
    %v1151 = vsub.f32 2.0, %v1149
    %v1152 = vmul.f32 %v1146, %v1150
    %v1153 = vmul.f32 %v1147, %v1151
    %v1154 = vmul.f32 %v1137, %v1152
    %v1155 = vmul.f32 %v1139, %v1153
    %1156 = vrot.lane.b32.xlu0 %v691, 40
    %v1157 = vpop.permute.xlu0 %1156
    %1158 = vrot.lane.b32.xlu0 %v694, 40
    %v1159 = vpop.permute.xlu0 %1158
    %v1163 = vsel %vm163, %v1154, 0
    %v1166 = vsel %vm163, %v1155, 0
    %1168 = vmatpush.msra.mxu0 0.0
    %1169 = vmatpush.msra.mxu0 0.0
    %1170 = vmatpush.msra.mxu0 0.0
    %1171 = vmatpush.msra.mxu0 0.0
    %1172 = vmatpush.msra.mxu0 0.0
    %1173 = vmatpush.msra.mxu0 0.0
    %1174 = vmatpush.msra.mxu0 0.0
    %1175 = vmatpush.msra.mxu0 0.0
    %1176 = vmatpush.msra.mxu0 0.0
    %1177 = vmatpush.msra.mxu0 0.0
    %1178 = vmatpush.msra.mxu0 0.0
    %1179 = vmatpush.msra.mxu0 0.0
    %1180 = vmatpush.msra.mxu0 0.0
    %1181 = vmatpush.msra.mxu0 0.0
    %1182 = vmatpush.msra.mxu0 %v1159
    %1183 = vmatpush.msra.mxu0 %v1157
    %1184 = vmatmul.f32.gmra.mxu0 %v1163
    %v1185 = vpop.f32.mrf.mxu0
    %v1186 = vadd.f32 0.0, %v1185
    %1187 = vmatmul.f32.gmra.mxu0 %v1166
    %v1188 = vpop.f32.mrf.mxu0
    %v1189 = vadd.f32 0.0, %v1188
    %1190 = vdwg.mxu0
    %v1192 = vsel %vm131, %v1186, 0
    %v1195 = vsel %vm131, %v1189, 0
    %1197 = vmatpush.msra.mxu0 0.0
    %1198 = vmatpush.msra.mxu0 0.0
    %1199 = vmatpush.msra.mxu0 0.0
    %1200 = vmatpush.msra.mxu0 0.0
    %1201 = vmatpush.msra.mxu0 0.0
    %1202 = vmatpush.msra.mxu0 0.0
    %1203 = vmatpush.msra.mxu0 0.0
    %1204 = vmatpush.msra.mxu0 0.0
    %1205 = vmatpush.msra.mxu0 0.0
    %1206 = vmatpush.msra.mxu0 0.0
    %1207 = vmatpush.msra.mxu0 0.0
    %1208 = vmatpush.msra.mxu0 0.0
    %1209 = vmatpush.msra.mxu0 0.0
    %1210 = vmatpush.msra.mxu0 0.0
    %1211 = vmatpush.msra.mxu0 0.0
    %1212 = vmatpush.msra.mxu0 %v665
    %1213 = vmatmul.f32.gmra.mxu0 %v1192
    %v1214 = vpop.f32.mrf.mxu0
    %v1215 = vadd.f32 0.0, %v1214
    %1216 = vmatmul.f32.gmra.mxu0 %v1195
    %v1217 = vpop.f32.mrf.mxu0
    %v1218 = vadd.f32 0.0, %v1217
    %1219 = vdwg.mxu0
    %v1220 = vadd.f32 %v1087, %v1215
    %v1221 = vadd.f32 %v1088, %v1218
    %v1222 = vperm.slane %v666, 0
    %v1223 = vadd.f32 %v1220, %v1222
    %v1224 = vadd.f32 %v1221, %v1222
    %v1225 = vmax.f32 %v1223, 0.0
    %v1226 = vmax.f32 %v1224, 0.0
    %v1227 = vld [vmem:[#allocation2 + $0xe0] sm:$0xff]
    %v1228 = vld [vmem:[#allocation2 + $0xe8] sm:$0xff]
    %v1229 = vld [vmem:[#allocation2 + $0xf0] sm:$0xff]
    %v1230 = vld [vmem:[#allocation2 + $0xf8] sm:$0xff]
    %v1231 = vld [vmem:[#allocation2 + $0x140] sm:$0xff]
    %v1232 = vld [vmem:[#allocation2 + $0x148] sm:$0xff]
    %v1233 = vld [vmem:[#allocation2 + $0x150] sm:$0xff]
    %v1234 = vld [vmem:[#allocation2 + $0x158] sm:$0xff]
    %v1235 = vld [vmem:[#allocation2 + $0x170] sm:$0x1]
    %v1237 = vsel %vm95, %v1225, 0
    %v1240 = vsel %vm95, %v1226, 0
    %1242 = vmatpush.msra.mxu0 0.0
    %1243 = vmatpush.msra.mxu0 0.0
    %1244 = vmatpush.msra.mxu0 0.0
    %1245 = vmatpush.msra.mxu0 0.0
    %1246 = vmatpush.msra.mxu0 0.0
    %1247 = vmatpush.msra.mxu0 0.0
    %1248 = vmatpush.msra.mxu0 0.0
    %1249 = vmatpush.msra.mxu0 0.0
    %1250 = vmatpush.msra.mxu0 0.0
    %1251 = vmatpush.msra.mxu0 0.0
    %1252 = vmatpush.msra.mxu0 0.0
    %1253 = vmatpush.msra.mxu0 0.0
    %1254 = vmatpush.msra.mxu0 %v1230
    %1255 = vmatpush.msra.mxu0 %v1229
    %1256 = vmatpush.msra.mxu0 %v1228
    %1257 = vmatpush.msra.mxu0 %v1227
    %1258 = vmatmul.f32.gmra.mxu0 %v1237
    %v1259 = vpop.f32.mrf.mxu0
    %v1260 = vadd.f32 0.0, %v1259
    %1261 = vmatmul.f32.gmra.mxu0 %v1240
    %v1262 = vpop.f32.mrf.mxu0
    %v1263 = vadd.f32 0.0, %v1262
    %1264 = vdwg.mxu0
    %1267 = vrot.lane.b32.xlu0 %v1260, 96
    %v1268 = vpop.permute.xlu0 %1267
    %1269 = vrot.lane.b32.xlu0 %v1263, 96
    %v1270 = vpop.permute.xlu0 %1269
    %v1271 = vsel %vm131, %v1260, 0
    %v1273 = vsel %vm131, %v1263, 0
    %v1275 = vsel %vm131, %v1268, 0
    %v1277 = vsel %vm131, %v1270, 0
    %1279 = vmatpush.xpose.msra.mxu0 0.0
    %1280 = vmatpush.xpose.msra.mxu0 0.0
    %1281 = vmatpush.xpose.msra.mxu0 0.0
    %1282 = vmatpush.xpose.msra.mxu0 0.0
    %1283 = vmatpush.xpose.msra.mxu0 0.0
    %1284 = vmatpush.xpose.msra.mxu0 0.0
    %1285 = vmatpush.xpose.msra.mxu0 0.0
    %1286 = vmatpush.xpose.msra.mxu0 0.0
    %1287 = vmatpush.xpose.msra.mxu0 0.0
    %1288 = vmatpush.xpose.msra.mxu0 0.0
    %1289 = vmatpush.xpose.msra.mxu0 0.0
    %1290 = vmatpush.xpose.msra.mxu0 0.0
    %1291 = vmatpush.xpose.msra.mxu0 0.0
    %1292 = vmatpush.xpose.msra.mxu0 0.0
    %1293 = vmatpush.xpose.msra.mxu0 %v1277
    %1294 = vmatpush.xpose.msra.mxu0 %v1275
    %1295 = vmatmul.f32.gmra.mxu0 %v1271
    %v1296 = vpop.f32.mrf.mxu0
    %v1297 = vadd.f32 %v84, %v1296
    %1298 = vmatmul.f32.gmra.mxu0 %v1273
    %v1299 = vpop.f32.mrf.mxu0
    %v1300 = vadd.f32 %v85, %v1299
    %1301 = vdwg.mxu0
    %v1302 = vsel %vm163, %v1297, -inf
    %1303 = vmax.xlane.f32.xlu0 %v1302
    %v1304 = vpop.xlane.xlu0 %1303
    %v1305 = vsel %vm163, %v1300, -inf
    %1306 = vmax.xlane.f32.xlu0 %v1305
    %v1307 = vpop.xlane.xlu0 %1306
    %v1308 = vsub.f32 %v1297, %v1304
    %v1309 = vsub.f32 %v1300, %v1307
    %v1310 = vmul.f32 %v1308, 1.442695
    %v1311 = vpow.pop %v1310
    %v1312 = vmul.f32 %v1309, 1.442695
    %v1313 = vpow.pop %v1312
    %v1314 = vsel %vm163, %v1311, 0.0
    %1315 = vadd.xlane.f32.xlu0 %v1314
    %v1316 = vpop.xlane.xlu0 %1315
    %v1317 = vsel %vm163, %v1313, 0.0
    %1318 = vadd.xlane.f32.xlu0 %v1317
    %v1319 = vpop.xlane.xlu0 %1318
    %v1320 = vrcp.pop %v1316
    %v1321 = vrcp.pop %v1319
    %v1322 = vmul.f32 %v1316, %v1320
    %v1323 = vmul.f32 %v1319, %v1321
    %v1324 = vsub.f32 2.0, %v1322
    %v1325 = vsub.f32 2.0, %v1323
    %v1326 = vmul.f32 %v1320, %v1324
    %v1327 = vmul.f32 %v1321, %v1325
    %v1328 = vmul.f32 %v1311, %v1326
    %v1329 = vmul.f32 %v1313, %v1327
    %1330 = vrot.lane.b32.xlu0 %v1260, 64
    %v1331 = vpop.permute.xlu0 %1330
    %1332 = vrot.lane.b32.xlu0 %v1263, 64
    %v1333 = vpop.permute.xlu0 %1332
    %v1337 = vsel %vm163, %v1328, 0
    %v1340 = vsel %vm163, %v1329, 0
    %1342 = vmatpush.msra.mxu0 0.0
    %1343 = vmatpush.msra.mxu0 0.0
    %1344 = vmatpush.msra.mxu0 0.0
    %1345 = vmatpush.msra.mxu0 0.0
    %1346 = vmatpush.msra.mxu0 0.0
    %1347 = vmatpush.msra.mxu0 0.0
    %1348 = vmatpush.msra.mxu0 0.0
    %1349 = vmatpush.msra.mxu0 0.0
    %1350 = vmatpush.msra.mxu0 0.0
    %1351 = vmatpush.msra.mxu0 0.0
    %1352 = vmatpush.msra.mxu0 0.0
    %1353 = vmatpush.msra.mxu0 0.0
    %1354 = vmatpush.msra.mxu0 0.0
    %1355 = vmatpush.msra.mxu0 0.0
    %1356 = vmatpush.msra.mxu0 %v1333
    %1357 = vmatpush.msra.mxu0 %v1331
    %1358 = vmatmul.f32.gmra.mxu0 %v1337
    %v1359 = vpop.f32.mrf.mxu0
    %v1360 = vadd.f32 0.0, %v1359
    %1361 = vmatmul.f32.gmra.mxu0 %v1340
    %v1362 = vpop.f32.mrf.mxu0
    %v1363 = vadd.f32 0.0, %v1362
    %1364 = vdwg.mxu0
    %1365 = vrot.lane.b32.xlu0 %v1260, 120
    %v1366 = vpop.permute.xlu0 %1365
    %1367 = vrot.lane.b32.xlu0 %v1263, 120
    %v1368 = vpop.permute.xlu0 %1367
    %1369 = vrot.lane.b32.xlu0 %v1260, 88
    %v1370 = vpop.permute.xlu0 %1369
    %1371 = vrot.lane.b32.xlu0 %v1263, 88
    %v1372 = vpop.permute.xlu0 %1371
    %v1373 = vsel %vm131, %v1366, 0
    %v1375 = vsel %vm131, %v1368, 0
    %v1377 = vsel %vm131, %v1370, 0
    %v1379 = vsel %vm131, %v1372, 0
    %1381 = vmatpush.xpose.msra.mxu0 0.0
    %1382 = vmatpush.xpose.msra.mxu0 0.0
    %1383 = vmatpush.xpose.msra.mxu0 0.0
    %1384 = vmatpush.xpose.msra.mxu0 0.0
    %1385 = vmatpush.xpose.msra.mxu0 0.0
    %1386 = vmatpush.xpose.msra.mxu0 0.0
    %1387 = vmatpush.xpose.msra.mxu0 0.0
    %1388 = vmatpush.xpose.msra.mxu0 0.0
    %1389 = vmatpush.xpose.msra.mxu0 0.0
    %1390 = vmatpush.xpose.msra.mxu0 0.0
    %1391 = vmatpush.xpose.msra.mxu0 0.0
    %1392 = vmatpush.xpose.msra.mxu0 0.0
    %1393 = vmatpush.xpose.msra.mxu0 0.0
    %1394 = vmatpush.xpose.msra.mxu0 0.0
    %1395 = vmatpush.xpose.msra.mxu0 %v1379
    %1396 = vmatpush.xpose.msra.mxu0 %v1377
    %1397 = vmatmul.f32.gmra.mxu0 %v1373
    %v1398 = vpop.f32.mrf.mxu0
    %v1399 = vadd.f32 %v84, %v1398
    %1400 = vmatmul.f32.gmra.mxu0 %v1375
    %v1401 = vpop.f32.mrf.mxu0
    %v1402 = vadd.f32 %v85, %v1401
    %1403 = vdwg.mxu0
    %v1404 = vsel %vm163, %v1399, -inf
    %1405 = vmax.xlane.f32.xlu0 %v1404
    %v1406 = vpop.xlane.xlu0 %1405
    %v1407 = vsel %vm163, %v1402, -inf
    %1408 = vmax.xlane.f32.xlu0 %v1407
    %v1409 = vpop.xlane.xlu0 %1408
    %v1410 = vsub.f32 %v1399, %v1406
    %v1411 = vsub.f32 %v1402, %v1409
    %v1412 = vmul.f32 %v1410, 1.442695
    %v1413 = vpow.pop %v1412
    %v1414 = vmul.f32 %v1411, 1.442695
    %v1415 = vpow.pop %v1414
    %v1416 = vsel %vm163, %v1413, 0.0
    %1417 = vadd.xlane.f32.xlu0 %v1416
    %v1418 = vpop.xlane.xlu0 %1417
    %v1419 = vsel %vm163, %v1415, 0.0
    %1420 = vadd.xlane.f32.xlu0 %v1419
    %v1421 = vpop.xlane.xlu0 %1420
    %v1422 = vrcp.pop %v1418
    %v1423 = vrcp.pop %v1421
    %v1424 = vmul.f32 %v1418, %v1422
    %v1425 = vmul.f32 %v1421, %v1423
    %v1426 = vsub.f32 2.0, %v1424
    %v1427 = vsub.f32 2.0, %v1425
    %v1428 = vmul.f32 %v1422, %v1426
    %v1429 = vmul.f32 %v1423, %v1427
    %v1430 = vmul.f32 %v1413, %v1428
    %v1431 = vmul.f32 %v1415, %v1429
    %1432 = vrot.lane.b32.xlu0 %v1260, 56
    %v1433 = vpop.permute.xlu0 %1432
    %1434 = vrot.lane.b32.xlu0 %v1263, 56
    %v1435 = vpop.permute.xlu0 %1434
    %v1439 = vsel %vm163, %v1430, 0
    %v1442 = vsel %vm163, %v1431, 0
    %1444 = vmatpush.msra.mxu0 0.0
    %1445 = vmatpush.msra.mxu0 0.0
    %1446 = vmatpush.msra.mxu0 0.0
    %1447 = vmatpush.msra.mxu0 0.0
    %1448 = vmatpush.msra.mxu0 0.0
    %1449 = vmatpush.msra.mxu0 0.0
    %1450 = vmatpush.msra.mxu0 0.0
    %1451 = vmatpush.msra.mxu0 0.0
    %1452 = vmatpush.msra.mxu0 0.0
    %1453 = vmatpush.msra.mxu0 0.0
    %1454 = vmatpush.msra.mxu0 0.0
    %1455 = vmatpush.msra.mxu0 0.0
    %1456 = vmatpush.msra.mxu0 0.0
    %1457 = vmatpush.msra.mxu0 0.0
    %1458 = vmatpush.msra.mxu0 %v1435
    %1459 = vmatpush.msra.mxu0 %v1433
    %1460 = vmatmul.f32.gmra.mxu0 %v1439
    %v1461 = vpop.f32.mrf.mxu0
    %v1462 = vadd.f32 0.0, %v1461
    %1463 = vmatmul.f32.gmra.mxu0 %v1442
    %v1464 = vpop.f32.mrf.mxu0
    %v1465 = vadd.f32 0.0, %v1464
    %1466 = vdwg.mxu0
    %v1468 = vsel %vm131, %v1462, 0
    %v1471 = vsel %vm131, %v1465, 0
    %1473 = vmatpush.msra.mxu0 0.0
    %1474 = vmatpush.msra.mxu0 0.0
    %1475 = vmatpush.msra.mxu0 0.0
    %1476 = vmatpush.msra.mxu0 0.0
    %1477 = vmatpush.msra.mxu0 0.0
    %1478 = vmatpush.msra.mxu0 0.0
    %1479 = vmatpush.msra.mxu0 0.0
    %1480 = vmatpush.msra.mxu0 0.0
    %1481 = vmatpush.msra.mxu0 0.0
    %1482 = vmatpush.msra.mxu0 0.0
    %1483 = vmatpush.msra.mxu0 0.0
    %1484 = vmatpush.msra.mxu0 0.0
    %1485 = vmatpush.msra.mxu0 0.0
    %1486 = vmatpush.msra.mxu0 0.0
    %1487 = vmatpush.msra.mxu0 0.0
    %1488 = vmatpush.msra.mxu0 %v1232
    %1489 = vmatmul.f32.gmra.mxu0 %v1468
    %v1490 = vpop.f32.mrf.mxu0
    %v1491 = vadd.f32 0.0, %v1490
    %1492 = vmatmul.f32.gmra.mxu0 %v1471
    %v1493 = vpop.f32.mrf.mxu0
    %v1494 = vadd.f32 0.0, %v1493
    %1495 = vdwg.mxu0
    %v1497 = vsel %vm131, %v1360, 0
    %v1500 = vsel %vm131, %v1363, 0
    %1502 = vmatpush.msra.mxu0 0.0
    %1503 = vmatpush.msra.mxu0 0.0
    %1504 = vmatpush.msra.mxu0 0.0
    %1505 = vmatpush.msra.mxu0 0.0
    %1506 = vmatpush.msra.mxu0 0.0
    %1507 = vmatpush.msra.mxu0 0.0
    %1508 = vmatpush.msra.mxu0 0.0
    %1509 = vmatpush.msra.mxu0 0.0
    %1510 = vmatpush.msra.mxu0 0.0
    %1511 = vmatpush.msra.mxu0 0.0
    %1512 = vmatpush.msra.mxu0 0.0
    %1513 = vmatpush.msra.mxu0 0.0
    %1514 = vmatpush.msra.mxu0 0.0
    %1515 = vmatpush.msra.mxu0 0.0
    %1516 = vmatpush.msra.mxu0 0.0
    %1517 = vmatpush.msra.mxu0 %v1231
    %1518 = vmatmul.f32.gmra.mxu0 %v1497
    %v1519 = vpop.f32.mrf.mxu0
    %v1520 = vadd.f32 %v1491, %v1519
    %1521 = vmatmul.f32.gmra.mxu0 %v1500
    %v1522 = vpop.f32.mrf.mxu0
    %v1523 = vadd.f32 %v1494, %v1522
    %1524 = vdwg.mxu0
    %1525 = vrot.lane.b32.xlu0 %v1260, 112
    %v1526 = vpop.permute.xlu0 %1525
    %1527 = vrot.lane.b32.xlu0 %v1263, 112
    %v1528 = vpop.permute.xlu0 %1527
    %1529 = vrot.lane.b32.xlu0 %v1260, 80
    %v1530 = vpop.permute.xlu0 %1529
    %1531 = vrot.lane.b32.xlu0 %v1263, 80
    %v1532 = vpop.permute.xlu0 %1531
    %v1533 = vsel %vm131, %v1526, 0
    %v1535 = vsel %vm131, %v1528, 0
    %v1537 = vsel %vm131, %v1530, 0
    %v1539 = vsel %vm131, %v1532, 0
    %1541 = vmatpush.xpose.msra.mxu0 0.0
    %1542 = vmatpush.xpose.msra.mxu0 0.0
    %1543 = vmatpush.xpose.msra.mxu0 0.0
    %1544 = vmatpush.xpose.msra.mxu0 0.0
    %1545 = vmatpush.xpose.msra.mxu0 0.0
    %1546 = vmatpush.xpose.msra.mxu0 0.0
    %1547 = vmatpush.xpose.msra.mxu0 0.0
    %1548 = vmatpush.xpose.msra.mxu0 0.0
    %1549 = vmatpush.xpose.msra.mxu0 0.0
    %1550 = vmatpush.xpose.msra.mxu0 0.0
    %1551 = vmatpush.xpose.msra.mxu0 0.0
    %1552 = vmatpush.xpose.msra.mxu0 0.0
    %1553 = vmatpush.xpose.msra.mxu0 0.0
    %1554 = vmatpush.xpose.msra.mxu0 0.0
    %1555 = vmatpush.xpose.msra.mxu0 %v1539
    %1556 = vmatpush.xpose.msra.mxu0 %v1537
    %1557 = vmatmul.f32.gmra.mxu0 %v1533
    %v1558 = vpop.f32.mrf.mxu0
    %v1559 = vadd.f32 %v84, %v1558
    %1560 = vmatmul.f32.gmra.mxu0 %v1535
    %v1561 = vpop.f32.mrf.mxu0
    %v1562 = vadd.f32 %v85, %v1561
    %1563 = vdwg.mxu0
    %v1564 = vsel %vm163, %v1559, -inf
    %1565 = vmax.xlane.f32.xlu0 %v1564
    %v1566 = vpop.xlane.xlu0 %1565
    %v1567 = vsel %vm163, %v1562, -inf
    %1568 = vmax.xlane.f32.xlu0 %v1567
    %v1569 = vpop.xlane.xlu0 %1568
    %v1570 = vsub.f32 %v1559, %v1566
    %v1571 = vsub.f32 %v1562, %v1569
    %v1572 = vmul.f32 %v1570, 1.442695
    %v1573 = vpow.pop %v1572
    %v1574 = vmul.f32 %v1571, 1.442695
    %v1575 = vpow.pop %v1574
    %v1576 = vsel %vm163, %v1573, 0.0
    %1577 = vadd.xlane.f32.xlu0 %v1576
    %v1578 = vpop.xlane.xlu0 %1577
    %v1579 = vsel %vm163, %v1575, 0.0
    %1580 = vadd.xlane.f32.xlu0 %v1579
    %v1581 = vpop.xlane.xlu0 %1580
    %v1582 = vrcp.pop %v1578
    %v1583 = vrcp.pop %v1581
    %v1584 = vmul.f32 %v1578, %v1582
    %v1585 = vmul.f32 %v1581, %v1583
    %v1586 = vsub.f32 2.0, %v1584
    %v1587 = vsub.f32 2.0, %v1585
    %v1588 = vmul.f32 %v1582, %v1586
    %v1589 = vmul.f32 %v1583, %v1587
    %v1590 = vmul.f32 %v1573, %v1588
    %v1591 = vmul.f32 %v1575, %v1589
    %1592 = vrot.lane.b32.xlu0 %v1260, 48
    %v1593 = vpop.permute.xlu0 %1592
    %1594 = vrot.lane.b32.xlu0 %v1263, 48
    %v1595 = vpop.permute.xlu0 %1594
    %v1599 = vsel %vm163, %v1590, 0
    %v1602 = vsel %vm163, %v1591, 0
    %1604 = vmatpush.msra.mxu0 0.0
    %1605 = vmatpush.msra.mxu0 0.0
    %1606 = vmatpush.msra.mxu0 0.0
    %1607 = vmatpush.msra.mxu0 0.0
    %1608 = vmatpush.msra.mxu0 0.0
    %1609 = vmatpush.msra.mxu0 0.0
    %1610 = vmatpush.msra.mxu0 0.0
    %1611 = vmatpush.msra.mxu0 0.0
    %1612 = vmatpush.msra.mxu0 0.0
    %1613 = vmatpush.msra.mxu0 0.0
    %1614 = vmatpush.msra.mxu0 0.0
    %1615 = vmatpush.msra.mxu0 0.0
    %1616 = vmatpush.msra.mxu0 0.0
    %1617 = vmatpush.msra.mxu0 0.0
    %1618 = vmatpush.msra.mxu0 %v1595
    %1619 = vmatpush.msra.mxu0 %v1593
    %1620 = vmatmul.f32.gmra.mxu0 %v1599
    %v1621 = vpop.f32.mrf.mxu0
    %v1622 = vadd.f32 0.0, %v1621
    %1623 = vmatmul.f32.gmra.mxu0 %v1602
    %v1624 = vpop.f32.mrf.mxu0
    %v1625 = vadd.f32 0.0, %v1624
    %1626 = vdwg.mxu0
    %v1628 = vsel %vm131, %v1622, 0
    %v1631 = vsel %vm131, %v1625, 0
    %1633 = vmatpush.msra.mxu0 0.0
    %1634 = vmatpush.msra.mxu0 0.0
    %1635 = vmatpush.msra.mxu0 0.0
    %1636 = vmatpush.msra.mxu0 0.0
    %1637 = vmatpush.msra.mxu0 0.0
    %1638 = vmatpush.msra.mxu0 0.0
    %1639 = vmatpush.msra.mxu0 0.0
    %1640 = vmatpush.msra.mxu0 0.0
    %1641 = vmatpush.msra.mxu0 0.0
    %1642 = vmatpush.msra.mxu0 0.0
    %1643 = vmatpush.msra.mxu0 0.0
    %1644 = vmatpush.msra.mxu0 0.0
    %1645 = vmatpush.msra.mxu0 0.0
    %1646 = vmatpush.msra.mxu0 0.0
    %1647 = vmatpush.msra.mxu0 0.0
    %1648 = vmatpush.msra.mxu0 %v1233
    %1649 = vmatmul.f32.gmra.mxu0 %v1628
    %v1650 = vpop.f32.mrf.mxu0
    %v1651 = vadd.f32 0.0, %v1650
    %1652 = vmatmul.f32.gmra.mxu0 %v1631
    %v1653 = vpop.f32.mrf.mxu0
    %v1654 = vadd.f32 0.0, %v1653
    %1655 = vdwg.mxu0
    %v1656 = vadd.f32 %v1520, %v1651
    %v1657 = vadd.f32 %v1523, %v1654
    %1658 = vrot.lane.b32.xlu0 %v1260, 104
    %v1659 = vpop.permute.xlu0 %1658
    %1660 = vrot.lane.b32.xlu0 %v1263, 104
    %v1661 = vpop.permute.xlu0 %1660
    %1662 = vrot.lane.b32.xlu0 %v1260, 72
    %v1663 = vpop.permute.xlu0 %1662
    %1664 = vrot.lane.b32.xlu0 %v1263, 72
    %v1665 = vpop.permute.xlu0 %1664
    %v1666 = vsel %vm131, %v1659, 0
    %v1668 = vsel %vm131, %v1661, 0
    %v1670 = vsel %vm131, %v1663, 0
    %v1672 = vsel %vm131, %v1665, 0
    %1674 = vmatpush.xpose.msra.mxu0 0.0
    %1675 = vmatpush.xpose.msra.mxu0 0.0
    %1676 = vmatpush.xpose.msra.mxu0 0.0
    %1677 = vmatpush.xpose.msra.mxu0 0.0
    %1678 = vmatpush.xpose.msra.mxu0 0.0
    %1679 = vmatpush.xpose.msra.mxu0 0.0
    %1680 = vmatpush.xpose.msra.mxu0 0.0
    %1681 = vmatpush.xpose.msra.mxu0 0.0
    %1682 = vmatpush.xpose.msra.mxu0 0.0
    %1683 = vmatpush.xpose.msra.mxu0 0.0
    %1684 = vmatpush.xpose.msra.mxu0 0.0
    %1685 = vmatpush.xpose.msra.mxu0 0.0
    %1686 = vmatpush.xpose.msra.mxu0 0.0
    %1687 = vmatpush.xpose.msra.mxu0 0.0
    %1688 = vmatpush.xpose.msra.mxu0 %v1672
    %1689 = vmatpush.xpose.msra.mxu0 %v1670
    %1690 = vmatmul.f32.gmra.mxu0 %v1666
    %v1691 = vpop.f32.mrf.mxu0
    %v1692 = vadd.f32 %v84, %v1691
    %1693 = vmatmul.f32.gmra.mxu0 %v1668
    %v1694 = vpop.f32.mrf.mxu0
    %v1695 = vadd.f32 %v85, %v1694
    %1696 = vdwg.mxu0
    %v1697 = vsel %vm163, %v1692, -inf
    %1698 = vmax.xlane.f32.xlu0 %v1697
    %v1699 = vpop.xlane.xlu0 %1698
    %v1700 = vsel %vm163, %v1695, -inf
    %1701 = vmax.xlane.f32.xlu0 %v1700
    %v1702 = vpop.xlane.xlu0 %1701
    %v1703 = vsub.f32 %v1692, %v1699
    %v1704 = vsub.f32 %v1695, %v1702
    %v1705 = vmul.f32 %v1703, 1.442695
    %v1706 = vpow.pop %v1705
    %v1707 = vmul.f32 %v1704, 1.442695
    %v1708 = vpow.pop %v1707
    %v1709 = vsel %vm163, %v1706, 0.0
    %1710 = vadd.xlane.f32.xlu0 %v1709
    %v1711 = vpop.xlane.xlu0 %1710
    %v1712 = vsel %vm163, %v1708, 0.0
    %1713 = vadd.xlane.f32.xlu0 %v1712
    %v1714 = vpop.xlane.xlu0 %1713
    %v1715 = vrcp.pop %v1711
    %v1716 = vrcp.pop %v1714
    %v1717 = vmul.f32 %v1711, %v1715
    %v1718 = vmul.f32 %v1714, %v1716
    %v1719 = vsub.f32 2.0, %v1717
    %v1720 = vsub.f32 2.0, %v1718
    %v1721 = vmul.f32 %v1715, %v1719
    %v1722 = vmul.f32 %v1716, %v1720
    %v1723 = vmul.f32 %v1706, %v1721
    %v1724 = vmul.f32 %v1708, %v1722
    %1725 = vrot.lane.b32.xlu0 %v1260, 40
    %v1726 = vpop.permute.xlu0 %1725
    %1727 = vrot.lane.b32.xlu0 %v1263, 40
    %v1728 = vpop.permute.xlu0 %1727
    %v1732 = vsel %vm163, %v1723, 0
    %v1735 = vsel %vm163, %v1724, 0
    %1737 = vmatpush.msra.mxu0 0.0
    %1738 = vmatpush.msra.mxu0 0.0
    %1739 = vmatpush.msra.mxu0 0.0
    %1740 = vmatpush.msra.mxu0 0.0
    %1741 = vmatpush.msra.mxu0 0.0
    %1742 = vmatpush.msra.mxu0 0.0
    %1743 = vmatpush.msra.mxu0 0.0
    %1744 = vmatpush.msra.mxu0 0.0
    %1745 = vmatpush.msra.mxu0 0.0
    %1746 = vmatpush.msra.mxu0 0.0
    %1747 = vmatpush.msra.mxu0 0.0
    %1748 = vmatpush.msra.mxu0 0.0
    %1749 = vmatpush.msra.mxu0 0.0
    %1750 = vmatpush.msra.mxu0 0.0
    %1751 = vmatpush.msra.mxu0 %v1728
    %1752 = vmatpush.msra.mxu0 %v1726
    %1753 = vmatmul.f32.gmra.mxu0 %v1732
    %v1754 = vpop.f32.mrf.mxu0
    %v1755 = vadd.f32 0.0, %v1754
    %1756 = vmatmul.f32.gmra.mxu0 %v1735
    %v1757 = vpop.f32.mrf.mxu0
    %v1758 = vadd.f32 0.0, %v1757
    %1759 = vdwg.mxu0
    %v1761 = vsel %vm131, %v1755, 0
    %v1764 = vsel %vm131, %v1758, 0
    %1766 = vmatpush.msra.mxu0 0.0
    %1767 = vmatpush.msra.mxu0 0.0
    %1768 = vmatpush.msra.mxu0 0.0
    %1769 = vmatpush.msra.mxu0 0.0
    %1770 = vmatpush.msra.mxu0 0.0
    %1771 = vmatpush.msra.mxu0 0.0
    %1772 = vmatpush.msra.mxu0 0.0
    %1773 = vmatpush.msra.mxu0 0.0
    %1774 = vmatpush.msra.mxu0 0.0
    %1775 = vmatpush.msra.mxu0 0.0
    %1776 = vmatpush.msra.mxu0 0.0
    %1777 = vmatpush.msra.mxu0 0.0
    %1778 = vmatpush.msra.mxu0 0.0
    %1779 = vmatpush.msra.mxu0 0.0
    %1780 = vmatpush.msra.mxu0 0.0
    %1781 = vmatpush.msra.mxu0 %v1234
    %1782 = vmatmul.f32.gmra.mxu0 %v1761
    %v1783 = vpop.f32.mrf.mxu0
    %v1784 = vadd.f32 0.0, %v1783
    %1785 = vmatmul.f32.gmra.mxu0 %v1764
    %v1786 = vpop.f32.mrf.mxu0
    %v1787 = vadd.f32 0.0, %v1786
    %1788 = vdwg.mxu0
    %v1789 = vadd.f32 %v1656, %v1784
    %v1790 = vadd.f32 %v1657, %v1787
    %v1791 = vperm.slane %v1235, 0
    %v1792 = vadd.f32 %v1789, %v1791
    %v1793 = vadd.f32 %v1790, %v1791
    %v1794 = vmax.f32 %v1792, 0.0
    %v1795 = vmax.f32 %v1793, 0.0
    %v1796 = vld [vmem:[#allocation2 + $0x178] sm:$0xff]
    %v1797 = vld [vmem:[#allocation2 + $0x180] sm:$0xff]
    %v1798 = vld [vmem:[#allocation2 + $0x188] sm:$0xff]
    %v1799 = vld [vmem:[#allocation2 + $0x190] sm:$0xff]
    %v1800 = vld [vmem:[#allocation2 + $0x198] sm:$0x1]
    %v1801 = vperm.slane %v1800, 0
    %v1803 = vsel %vm95, %v1794, 0
    %v1806 = vsel %vm95, %v1795, 0
    %1808 = vmatpush.msra.mxu0 0.0
    %1809 = vmatpush.msra.mxu0 0.0
    %1810 = vmatpush.msra.mxu0 0.0
    %1811 = vmatpush.msra.mxu0 0.0
    %1812 = vmatpush.msra.mxu0 0.0
    %1813 = vmatpush.msra.mxu0 0.0
    %1814 = vmatpush.msra.mxu0 0.0
    %1815 = vmatpush.msra.mxu0 0.0
    %1816 = vmatpush.msra.mxu0 0.0
    %1817 = vmatpush.msra.mxu0 0.0
    %1818 = vmatpush.msra.mxu0 0.0
    %1819 = vmatpush.msra.mxu0 0.0
    %1820 = vmatpush.msra.mxu0 %v1799
    %1821 = vmatpush.msra.mxu0 %v1798
    %1822 = vmatpush.msra.mxu0 %v1797
    %1823 = vmatpush.msra.mxu0 %v1796
    %1824 = vmatmul.f32.gmra.mxu0 %v1803
    %v1825 = vpop.f32.mrf.mxu0
    %v1826 = vadd.f32 %v1801, %v1825
    %1827 = vmatmul.f32.gmra.mxu0 %v1806
    %v1828 = vpop.f32.mrf.mxu0
    %v1829 = vadd.f32 %v1801, %v1828
    %1830 = vdwg.mxu0
    %1831 = vst [vmem:[%s2] sm:$0xff] %v1826
    %1832 = vst [vmem:[%s2 + $0x8] sm:$0xff] %v1829
    // Predicated region
    $region14: #{bigram_lm_forward.1} parent=1 // pred_check
      _
    $region15: #{bigram_lm_forward.1} parent=1 // pred_check_branch
      %1834 = sbr.rel (0) target = $region17
    $region16: #{bigram_lm_forward.1} parent=1 // pred_region
      _
    $region17: #{bigram_lm_forward.1} parent=1 // pred_fallthru
      _
    // Predicated region
    $region18: #{bigram_lm_forward.1} parent=1 // pred_check
      _
    $region19: #{bigram_lm_forward.1} parent=1 // pred_check_branch
      %1836 = sbr.rel (0) target = $region21
    $region20: #{bigram_lm_forward.1} parent=1 // pred_region
      _
    $region21: #{bigram_lm_forward.1} parent=1 // pred_fallthru
      _
    %1837 = vsyncpa [#allocation3], 1

</llo_original>
